<compile_context>
chip_gen: v5e
topology: v5e:2x2
jax: 0.10.0
libtpu: 0.0.40
codegen_flags: <defaults>
</compile_context>

<pallas_src>
import functools

import jax
import jax.numpy as jnp
import numpy as np
from jax import lax
from jax.experimental import pallas as pl
from jax.experimental.pallas import tpu as pltpu


# ----------------------------------------------------------------------------
# Fused kernel: one grid step == one transformer-encoder layer over the whole
# (flattened) batch.  o_ref doubles as the VMEM-resident activation carry.
# ----------------------------------------------------------------------------
def _fused_mixer_kernel(num_heads, eps,
                        x_ref, bias_ref,
                        wq_ref, wk_ref, wv_ref,
                        bq_ref, bk_ref, bv_ref,
                        wo_ref, bo_ref,
                        ln1w_ref, ln1b_ref, ln2w_ref, ln2b_ref,
                        w1_ref, b1_ref, w2_ref, b2_ref,
                        o_ref):
    l = pl.program_id(0)

    # Layer 0: seed the resident activation buffer from the input block.
    @pl.when(l == 0)
    def _():
        o_ref[...] = x_ref[...].astype(jnp.float32)

    x = o_ref[...]                                  # (B*S, E) f32, VMEM-resident
    BS, E = x.shape
    H = num_heads
    Dh = E // H
    B = bias_ref.shape[0]
    S = BS // B
    scale = 1.0 / float(np.sqrt(Dh))

    bias = bias_ref[...]                            # (B, 1, S) additive key mask

    # ---- multi-head self attention (per-head weight tiles, no lane slicing) --
    attn = None
    for h in range(H):                              # static loop, H small
        q = jnp.dot(x, wq_ref[h], preferred_element_type=jnp.float32) + bq_ref[h]
        k = jnp.dot(x, wk_ref[h], preferred_element_type=jnp.float32) + bk_ref[h]
        v = jnp.dot(x, wv_ref[h], preferred_element_type=jnp.float32) + bv_ref[h]
        q3 = q.reshape(B, S, Dh)
        k3 = k.reshape(B, S, Dh)
        v3 = v.reshape(B, S, Dh)
        s = jnp.einsum("bqd,bkd->bqk", q3, k3,
                       preferred_element_type=jnp.float32) * scale + bias
        m = jnp.max(s, axis=-1, keepdims=True)
        p = jnp.exp(s - m)
        denom = jnp.sum(p, axis=-1, keepdims=True)
        p = p * pl.reciprocal(denom, approx=True)   # EUP, not VALU division
        oh = jnp.einsum("bqk,bkd->bqd", p, v3,
                        preferred_element_type=jnp.float32)
        # concat_h(o_h) @ Wo  ==  sum_h  o_h @ Wo_rows_h   (no concatenate)
        contrib = jnp.dot(oh.reshape(BS, Dh), wo_ref[h],
                          preferred_element_type=jnp.float32)
        attn = contrib if attn is None else attn + contrib
    attn = attn + bo_ref[...]

    # ---- residual + post-LayerNorm 1 (norm_first=False) ----
    y = x + attn                                    # dropout == identity (eval)
    mu = jnp.mean(y, axis=-1, keepdims=True)
    var = jnp.mean((y - mu) * (y - mu), axis=-1, keepdims=True)
    y = (y - mu) * lax.rsqrt(var + eps) * ln1w_ref[...] + ln1b_ref[...]

    # ---- feed-forward (ReLU) ----
    h1 = jnp.dot(y, w1_ref[...], preferred_element_type=jnp.float32) + b1_ref[...]
    h1 = jnp.maximum(h1, 0.0)
    ffn = jnp.dot(h1, w2_ref[...], preferred_element_type=jnp.float32) + b2_ref[...]

    # ---- residual + post-LayerNorm 2 ----
    z = y + ffn
    mu2 = jnp.mean(z, axis=-1, keepdims=True)
    var2 = jnp.mean((z - mu2) * (z - mu2), axis=-1, keepdims=True)
    z = (z - mu2) * lax.rsqrt(var2 + eps) * ln2w_ref[...] + ln2b_ref[...]

    o_ref[...] = z                                  # carry to next layer / final


# ----------------------------------------------------------------------------
# Wrapper: whole forward pass (all layers, whole batch) in one pallas_call.
# ----------------------------------------------------------------------------
def _layer_spec(block_dims):
    """BlockSpec for a weight stacked along a leading layer axis."""
    nd = len(block_dims)
    return pl.BlockSpec((None,) + tuple(block_dims),
                        lambda l, nd=nd: (l,) + (0,) * nd)


def mixer_transformer_forward(params, x, src_key_padding_mask, num_heads, eps=1e-5):
    """Equivalent of MixerTransformer.forward (dropout in eval mode)."""
    B, S, E = x.shape
    L, H, _, Dh = params["wq"].shape
    F = params["w1"].shape[-1]
    assert H == num_heads and H * Dh == E

    if src_key_padding_mask is None:
        bias = jnp.zeros((B, 1, S), jnp.float32)
    else:
        # True == padded key -> large negative additive bias before softmax.
        # NOTE: PyTorch uses -inf; a fully-masked row would be NaN there but a
        # uniform distribution here (documented behavioral deviation).
        bias = jnp.where(src_key_padding_mask, -1e9, 0.0).astype(jnp.float32)
        bias = bias.reshape(B, 1, S)

    x_flat = x.reshape(B * S, E).astype(jnp.float32)

    in_specs = [
        pl.BlockSpec((B * S, E), lambda l: (0, 0)),      # x (resident, read @ l=0)
        pl.BlockSpec((B, 1, S), lambda l: (0, 0, 0)),    # additive mask bias
        _layer_spec((H, E, Dh)),                         # wq
        _layer_spec((H, E, Dh)),                         # wk
        _layer_spec((H, E, Dh)),                         # wv
        _layer_spec((H, 1, Dh)),                         # bq
        _layer_spec((H, 1, Dh)),                         # bk
        _layer_spec((H, 1, Dh)),                         # bv
        _layer_spec((H, Dh, E)),                         # wo
        _layer_spec((1, E)),                             # bo
        _layer_spec((1, E)),                             # ln1w
        _layer_spec((1, E)),                             # ln1b
        _layer_spec((1, E)),                             # ln2w
        _layer_spec((1, E)),                             # ln2b
        _layer_spec((E, F)),                             # w1
        _layer_spec((1, F)),                             # b1
        _layer_spec((F, E)),                             # w2
        _layer_spec((1, E)),                             # b2
    ]

    kernel = functools.partial(_fused_mixer_kernel, num_heads, eps)
    out_flat = pl.pallas_call(
        kernel,
        out_shape=jax.ShapeDtypeStruct((B * S, E), jnp.float32),
        grid=(L,),
        in_specs=in_specs,
        out_specs=pl.BlockSpec((B * S, E), lambda l: (0, 0)),
        compiler_params=pltpu.CompilerParams(
            dimension_semantics=("arbitrary",)),          # layers are sequential
    )(x_flat, bias,
      params["wq"], params["wk"], params["wv"],
      params["bq"], params["bk"], params["bv"],
      params["wo"], params["bo"],
      params["ln1w"], params["ln1b"], params["ln2w"], params["ln2b"],
      params["w1"], params["b1"], params["w2"], params["b2"])

    return out_flat.reshape(B, S, E).astype(x.dtype)


# ----------------------------------------------------------------------------
# Deterministic synthetic parameter init (per-head layout, stacked over layers).
# ----------------------------------------------------------------------------
def init_params(key, embed_dim, num_heads, num_blocks, ffn_dim_multiplier):
    E, H, L = embed_dim, num_heads, num_blocks
    Dh = E // H
    F = E * ffn_dim_multiplier
    ks = jax.random.split(key, 8)

    def nrm(k, shape, scale):
        return jax.random.normal(k, shape, jnp.float32) * scale

    return {
        "wq": nrm(ks[0], (L, H, E, Dh), 1.0 / np.sqrt(E)),
        "wk": nrm(ks[1], (L, H, E, Dh), 1.0 / np.sqrt(E)),
        "wv": nrm(ks[2], (L, H, E, Dh), 1.0 / np.sqrt(E)),
        "bq": nrm(ks[3], (L, H, 1, Dh), 0.02),
        "bk": nrm(ks[4], (L, H, 1, Dh), 0.02),
        "bv": nrm(ks[5], (L, H, 1, Dh), 0.02),
        "wo": nrm(ks[6], (L, H, Dh, E), 1.0 / np.sqrt(E)),
        "bo": jnp.zeros((L, 1, E), jnp.float32),
        "ln1w": jnp.ones((L, 1, E), jnp.float32),
        "ln1b": jnp.zeros((L, 1, E), jnp.float32),
        "ln2w": jnp.ones((L, 1, E), jnp.float32),
        "ln2b": jnp.zeros((L, 1, E), jnp.float32),
        "w1": nrm(ks[7], (L, E, F), 1.0 / np.sqrt(E)),
        "b1": jnp.zeros((L, 1, F), jnp.float32),
        "w2": nrm(jax.random.fold_in(key, 99), (L, F, E), 1.0 / np.sqrt(F)),
        "b2": jnp.zeros((L, 1, E), jnp.float32),
    }


# ----------------------------------------------------------------------------
# Pure-JAX reference (standard full-matrix MHA formulation, matches PyTorch
# TransformerEncoderLayer math with post-LayerNorm and ReLU FFN).
# ----------------------------------------------------------------------------
def reference_forward(params, x, src_key_padding_mask, num_heads, eps=1e-5):
    B, S, E = x.shape
    L, H, _, Dh = params["wq"].shape
    if src_key_padding_mask is None:
        bias = jnp.zeros((B, 1, 1, S), jnp.float32)
    else:
        bias = jnp.where(src_key_padding_mask, -1e9, 0.0).reshape(B, 1, 1, S)

    def ln(v, w, b):
        mu = jnp.mean(v, axis=-1, keepdims=True)
        var = jnp.mean((v - mu) ** 2, axis=-1, keepdims=True)
        return (v - mu) / jnp.sqrt(var + eps) * w + b

    for l in range(L):
        wq = params["wq"][l].transpose(1, 0, 2).reshape(E, E)   # (E, H*Dh)
        wk = params["wk"][l].transpose(1, 0, 2).reshape(E, E)
        wv = params["wv"][l].transpose(1, 0, 2).reshape(E, E)
        bq = params["bq"][l][:, 0, :].reshape(1, E)
        bk = params["bk"][l][:, 0, :].reshape(1, E)
        bv = params["bv"][l][:, 0, :].reshape(1, E)
        wo = params["wo"][l].reshape(E, E)                      # (H*Dh, E)

        q = (x @ wq + bq).reshape(B, S, H, Dh).transpose(0, 2, 1, 3)
        k = (x @ wk + bk).reshape(B, S, H, Dh).transpose(0, 2, 1, 3)
        v = (x @ wv + bv).reshape(B, S, H, Dh).transpose(0, 2, 1, 3)
        s = jnp.einsum("bhqd,bhkd->bhqk", q, k) / np.sqrt(Dh) + bias
        a = jax.nn.softmax(s, axis=-1)
        o = jnp.einsum("bhqk,bhkd->bhqd", a, v).transpose(0, 2, 1, 3).reshape(B, S, E)
        o = o @ wo + params["bo"][l]
        y = ln(x + o, params["ln1w"][l], params["ln1b"][l])
        f = jnp.maximum(y @ params["w1"][l] + params["b1"][l], 0.0)
        f = f @ params["w2"][l] + params["b2"][l]
        x = ln(y + f, params["ln2w"][l], params["ln2b"][l])
    return x


if __name__ == "__main__":
    # Module config: MixerTransformer(embed_dim=32, num_heads=4, num_blocks=2,
    #                                 ffn_dim_multiplier=4, dropout_rate=0.0)
    embed_dim, num_heads, num_blocks, ffn_mult = 32, 4, 2, 4
    B, S = 2, 8

    key = jax.random.PRNGKey(0)
    kparams, kx = jax.random.split(key)
    params = init_params(kparams, embed_dim, num_heads, num_blocks, ffn_mult)
    embedded_entities_seq = jax.random.normal(kx, (B, S, embed_dim), jnp.float32)

    # No-mask case (module default).
    out = mixer_transformer_forward(params, embedded_entities_seq, None, num_heads)
    out = jax.block_until_ready(out)
    ref = reference_forward(params, embedded_entities_seq, None, num_heads)
    np.testing.assert_allclose(np.asarray(out), np.asarray(ref), atol=3e-3, rtol=3e-3)

    # Partial key-padding-mask case.
    mask = jnp.zeros((B, S), dtype=bool).at[1, -2:].set(True)
    out_m = mixer_transformer_forward(params, embedded_entities_seq, mask, num_heads)
    out_m = jax.block_until_ready(out_m)
    ref_m = reference_forward(params, embedded_entities_seq, mask, num_heads)
    np.testing.assert_allclose(np.asarray(out_m), np.asarray(ref_m), atol=3e-3, rtol=3e-3)

    print("KERNEL_OK")
</pallas_src>

<mosaic_0001>
module attributes {stable_mosaic.version = 11 : i64} {
  func.func @_fused_mixer_kernel(%arg0: i32, %arg1: memref<16x32xf32, #tpu.memory_space<vmem>>, %arg2: memref<2x1x8xf32, #tpu.memory_space<vmem>>, %arg3: memref<1x4x32x8xf32, #tpu.memory_space<vmem>>, %arg4: memref<1x4x32x8xf32, #tpu.memory_space<vmem>>, %arg5: memref<1x4x32x8xf32, #tpu.memory_space<vmem>>, %arg6: memref<1x4x1x8xf32, #tpu.memory_space<vmem>>, %arg7: memref<1x4x1x8xf32, #tpu.memory_space<vmem>>, %arg8: memref<1x4x1x8xf32, #tpu.memory_space<vmem>>, %arg9: memref<1x4x8x32xf32, #tpu.memory_space<vmem>>, %arg10: memref<1x1x32xf32, #tpu.memory_space<vmem>>, %arg11: memref<1x1x32xf32, #tpu.memory_space<vmem>>, %arg12: memref<1x1x32xf32, #tpu.memory_space<vmem>>, %arg13: memref<1x1x32xf32, #tpu.memory_space<vmem>>, %arg14: memref<1x1x32xf32, #tpu.memory_space<vmem>>, %arg15: memref<1x32x128xf32, #tpu.memory_space<vmem>>, %arg16: memref<1x1x128xf32, #tpu.memory_space<vmem>>, %arg17: memref<1x128x32xf32, #tpu.memory_space<vmem>>, %arg18: memref<1x1x32xf32, #tpu.memory_space<vmem>>, %arg19: memref<16x32xf32, #tpu.memory_space<vmem>>) attributes {dimension_semantics = [#tpu.dimension_semantics<arbitrary>], iteration_bounds = array<i64: 2>, scalar_prefetch = 0 : i64, scratch_operands = 0 : i64, tpu.core_type = #tpu.core_type<tc>, window_params = [{pipeline_mode = #tpu.pipeline_mode<synchronous>, transform_indices = @transform_0, window_bounds = array<i64: 16, 32>}, {pipeline_mode = #tpu.pipeline_mode<synchronous>, transform_indices = @transform_1, window_bounds = array<i64: 2, 1, 8>}, {transform_indices = @transform_2, window_bounds = array<i64: 1, 4, 32, 8>}, {transform_indices = @transform_3, window_bounds = array<i64: 1, 4, 32, 8>}, {transform_indices = @transform_4, window_bounds = array<i64: 1, 4, 32, 8>}, {transform_indices = @transform_5, window_bounds = array<i64: 1, 4, 1, 8>}, {transform_indices = @transform_6, window_bounds = array<i64: 1, 4, 1, 8>}, {transform_indices = @transform_7, window_bounds = array<i64: 1, 4, 1, 8>}, {transform_indices = @transform_8, window_bounds = array<i64: 1, 4, 8, 32>}, {transform_indices = @transform_9, window_bounds = array<i64: 1, 1, 32>}, {transform_indices = @transform_10, window_bounds = array<i64: 1, 1, 32>}, {transform_indices = @transform_11, window_bounds = array<i64: 1, 1, 32>}, {transform_indices = @transform_12, window_bounds = array<i64: 1, 1, 32>}, {transform_indices = @transform_13, window_bounds = array<i64: 1, 1, 32>}, {transform_indices = @transform_14, window_bounds = array<i64: 1, 32, 128>}, {transform_indices = @transform_15, window_bounds = array<i64: 1, 1, 128>}, {transform_indices = @transform_16, window_bounds = array<i64: 1, 128, 32>}, {transform_indices = @transform_17, window_bounds = array<i64: 1, 1, 32>}, {pipeline_mode = #tpu.pipeline_mode<synchronous>, transform_indices = @transform_18, window_bounds = array<i64: 16, 32>}]} {
    %c0_i32 = arith.constant 0 : i32
    %0 = arith.cmpi eq, %arg0, %c0_i32 : i32
    %1 = arith.extui %0 : i1 to i32
    %c0_i32_0 = arith.constant 0 : i32
    %2 = arith.cmpi ne, %1, %c0_i32_0 : i32
    scf.if %2 {
      %c0_191 = arith.constant 0 : index
      %c0_192 = arith.constant 0 : index
      %263 = vector.load %arg1[%c0_191, %c0_192] : memref<16x32xf32, #tpu.memory_space<vmem>>, vector<16x32xf32>
      %c0_193 = arith.constant 0 : index
      %c0_194 = arith.constant 0 : index
      %264 = vector.load %arg19[%c0_193, %c0_194] : memref<16x32xf32, #tpu.memory_space<vmem>>, vector<16x32xf32>
      tpu.vector_store %arg19[%c0_193, %c0_194], %263 {strides = array<i32>} : memref<16x32xf32, #tpu.memory_space<vmem>>, vector<16x32xf32>,
    } else {
    }
    %c0 = arith.constant 0 : index
    %c0_1 = arith.constant 0 : index
    %3 = vector.load %arg19[%c0, %c0_1] : memref<16x32xf32, #tpu.memory_space<vmem>>, vector<16x32xf32>
    %c0_2 = arith.constant 0 : index
    %c0_3 = arith.constant 0 : index
    %c0_4 = arith.constant 0 : index
    %4 = vector.load %arg2[%c0_2, %c0_3, %c0_4] : memref<2x1x8xf32, #tpu.memory_space<vmem>>, vector<2x1x8xf32>
    %c0_5 = arith.constant 0 : index
    %c0_6 = arith.constant 0 : index
    %c0_7 = arith.constant 0 : index
    %c0_8 = arith.constant 0 : index
    %5 = vector.load %arg3[%c0_5, %c0_6, %c0_7, %c0_8] : memref<1x4x32x8xf32, #tpu.memory_space<vmem>>, vector<1x1x32x8xf32>
    %6 = vector.shape_cast %5 : vector<1x1x32x8xf32> to vector<32x8xf32>
    %cst = arith.constant dense<0.000000e+00> : vector<16x8xf32>
    %7 = tpu.matmul %3, %6, %cst {dimension_numbers = #tpu.dot_dimension_numbers<[1], [0], [0], [1], [0, 0, 1, 1], [], []>} : vector<16x32xf32>, vector<32x8xf32>, vector<16x8xf32> -> vector<16x8xf32>
    %c0_9 = arith.constant 0 : index
    %c0_10 = arith.constant 0 : index
    %c0_11 = arith.constant 0 : index
    %c0_12 = arith.constant 0 : index
    %8 = vector.load %arg6[%c0_9, %c0_10, %c0_11, %c0_12] : memref<1x4x1x8xf32, #tpu.memory_space<vmem>>, vector<1x1x1x8xf32>
    %9 = vector.shape_cast %8 : vector<1x1x1x8xf32> to vector<1x8xf32>
    %10 = vector.broadcast %9 : vector<1x8xf32> to vector<16x8xf32>
    %11 = arith.addf %7, %10 : vector<16x8xf32>
    %c0_13 = arith.constant 0 : index
    %c0_14 = arith.constant 0 : index
    %c0_15 = arith.constant 0 : index
    %c0_16 = arith.constant 0 : index
    %12 = vector.load %arg4[%c0_13, %c0_14, %c0_15, %c0_16] : memref<1x4x32x8xf32, #tpu.memory_space<vmem>>, vector<1x1x32x8xf32>
    %13 = vector.shape_cast %12 : vector<1x1x32x8xf32> to vector<32x8xf32>
    %cst_17 = arith.constant dense<0.000000e+00> : vector<16x8xf32>
    %14 = tpu.matmul %3, %13, %cst_17 {dimension_numbers = #tpu.dot_dimension_numbers<[1], [0], [0], [1], [0, 0, 1, 1], [], []>} : vector<16x32xf32>, vector<32x8xf32>, vector<16x8xf32> -> vector<16x8xf32>
    %c0_18 = arith.constant 0 : index
    %c0_19 = arith.constant 0 : index
    %c0_20 = arith.constant 0 : index
    %c0_21 = arith.constant 0 : index
    %15 = vector.load %arg7[%c0_18, %c0_19, %c0_20, %c0_21] : memref<1x4x1x8xf32, #tpu.memory_space<vmem>>, vector<1x1x1x8xf32>
    %16 = vector.shape_cast %15 : vector<1x1x1x8xf32> to vector<1x8xf32>
    %17 = vector.broadcast %16 : vector<1x8xf32> to vector<16x8xf32>
    %18 = arith.addf %14, %17 : vector<16x8xf32>
    %c0_22 = arith.constant 0 : index
    %c0_23 = arith.constant 0 : index
    %c0_24 = arith.constant 0 : index
    %c0_25 = arith.constant 0 : index
    %19 = vector.load %arg5[%c0_22, %c0_23, %c0_24, %c0_25] : memref<1x4x32x8xf32, #tpu.memory_space<vmem>>, vector<1x1x32x8xf32>
    %20 = vector.shape_cast %19 : vector<1x1x32x8xf32> to vector<32x8xf32>
    %cst_26 = arith.constant dense<0.000000e+00> : vector<16x8xf32>
    %21 = tpu.matmul %3, %20, %cst_26 {dimension_numbers = #tpu.dot_dimension_numbers<[1], [0], [0], [1], [0, 0, 1, 1], [], []>} : vector<16x32xf32>, vector<32x8xf32>, vector<16x8xf32> -> vector<16x8xf32>
    %c0_27 = arith.constant 0 : index
    %c0_28 = arith.constant 0 : index
    %c0_29 = arith.constant 0 : index
    %c0_30 = arith.constant 0 : index
    %22 = vector.load %arg8[%c0_27, %c0_28, %c0_29, %c0_30] : memref<1x4x1x8xf32, #tpu.memory_space<vmem>>, vector<1x1x1x8xf32>
    %23 = vector.shape_cast %22 : vector<1x1x1x8xf32> to vector<1x8xf32>
    %24 = vector.broadcast %23 : vector<1x8xf32> to vector<16x8xf32>
    %25 = arith.addf %21, %24 : vector<16x8xf32>
    %26 = vector.shape_cast %11 : vector<16x8xf32> to vector<2x8x8xf32>
    %27 = vector.shape_cast %18 : vector<16x8xf32> to vector<2x8x8xf32>
    %28 = vector.shape_cast %25 : vector<16x8xf32> to vector<2x8x8xf32>
    "tpu.trace_start"() <{level = 10 : i32, message = "bqd,bkd->bqk"}> : () -> ()
    %cst_31 = arith.constant dense<0.000000e+00> : vector<2x8x8xf32>
    %29 = tpu.matmul %26, %27, %cst_31 {dimension_numbers = #tpu.dot_dimension_numbers<[2], [2], [1], [1], [0, 0, 0, 1, 1, 1], [0], [0]>} : vector<2x8x8xf32>, vector<2x8x8xf32>, vector<2x8x8xf32> -> vector<2x8x8xf32>
    "tpu.trace_stop"() : () -> ()
    %cst_32 = arith.constant 0.353553385 : f32
    %30 = vector.broadcast %cst_32 : f32 to vector<2x8x8xf32>
    %31 = arith.mulf %29, %30 : vector<2x8x8xf32>
    %32 = vector.broadcast %4 : vector<2x1x8xf32> to vector<2x8x8xf32>
    %33 = arith.addf %31, %32 : vector<2x8x8xf32>
    %cst_33 = arith.constant dense<0xFF800000> : vector<2x8xf32>
    %34 = vector.multi_reduction <maximumf>, %33, %cst_33 [2] : vector<2x8x8xf32> to vector<2x8xf32>
    %35 = vector.shape_cast %34 : vector<2x8xf32> to vector<2x8x1xf32>
    %36 = vector.broadcast %35 : vector<2x8x1xf32> to vector<2x8x8xf32>
    %37 = arith.subf %33, %36 : vector<2x8x8xf32>
    %38 = math.exp %37 : vector<2x8x8xf32>
    %cst_34 = arith.constant dense<0.000000e+00> : vector<2x8xf32>
    %39 = vector.multi_reduction <add>, %38, %cst_34 [2] : vector<2x8x8xf32> to vector<2x8xf32>
    %40 = vector.shape_cast %39 : vector<2x8xf32> to vector<2x8x1xf32>
    %41 = tpu.reciprocal %40 {approx = true} : vector<2x8x1xf32> -> vector<2x8x1xf32>
    %42 = vector.broadcast %41 : vector<2x8x1xf32> to vector<2x8x8xf32>
    %43 = arith.mulf %38, %42 : vector<2x8x8xf32>
    "tpu.trace_start"() <{level = 10 : i32, message = "bqk,bkd->bqd"}> : () -> ()
    %cst_35 = arith.constant dense<0.000000e+00> : vector<2x8x8xf32>
    %44 = tpu.matmul %43, %28, %cst_35 {dimension_numbers = #tpu.dot_dimension_numbers<[2], [1], [1], [2], [0, 0, 0, 1, 1, 2], [0], [0]>} : vector<2x8x8xf32>, vector<2x8x8xf32>, vector<2x8x8xf32> -> vector<2x8x8xf32>
    "tpu.trace_stop"() : () -> ()
    %45 = vector.shape_cast %44 : vector<2x8x8xf32> to vector<16x8xf32>
    %c0_36 = arith.constant 0 : index
    %c0_37 = arith.constant 0 : index
    %c0_38 = arith.constant 0 : index
    %c0_39 = arith.constant 0 : index
    %46 = vector.load %arg9[%c0_36, %c0_37, %c0_38, %c0_39] : memref<1x4x8x32xf32, #tpu.memory_space<vmem>>, vector<1x1x8x32xf32>
    %47 = vector.shape_cast %46 : vector<1x1x8x32xf32> to vector<8x32xf32>
    %cst_40 = arith.constant dense<0.000000e+00> : vector<16x32xf32>
    %48 = tpu.matmul %45, %47, %cst_40 {dimension_numbers = #tpu.dot_dimension_numbers<[1], [0], [0], [1], [0, 0, 1, 1], [], []>} : vector<16x8xf32>, vector<8x32xf32>, vector<16x32xf32> -> vector<16x32xf32>
    %c0_41 = arith.constant 0 : index
    %c1 = arith.constant 1 : index
    %c0_42 = arith.constant 0 : index
    %c0_43 = arith.constant 0 : index
    %49 = vector.load %arg3[%c0_41, %c1, %c0_42, %c0_43] : memref<1x4x32x8xf32, #tpu.memory_space<vmem>>, vector<1x1x32x8xf32>
    %50 = vector.shape_cast %49 : vector<1x1x32x8xf32> to vector<32x8xf32>
    %cst_44 = arith.constant dense<0.000000e+00> : vector<16x8xf32>
    %51 = tpu.matmul %3, %50, %cst_44 {dimension_numbers = #tpu.dot_dimension_numbers<[1], [0], [0], [1], [0, 0, 1, 1], [], []>} : vector<16x32xf32>, vector<32x8xf32>, vector<16x8xf32> -> vector<16x8xf32>
    %c0_45 = arith.constant 0 : index
    %c1_46 = arith.constant 1 : index
    %c0_47 = arith.constant 0 : index
    %c0_48 = arith.constant 0 : index
    %52 = vector.load %arg6[%c0_45, %c1_46, %c0_47, %c0_48] : memref<1x4x1x8xf32, #tpu.memory_space<vmem>>, vector<1x1x1x8xf32>
    %53 = vector.shape_cast %52 : vector<1x1x1x8xf32> to vector<1x8xf32>
    %54 = vector.broadcast %53 : vector<1x8xf32> to vector<16x8xf32>
    %55 = arith.addf %51, %54 : vector<16x8xf32>
    %c0_49 = arith.constant 0 : index
    %c1_50 = arith.constant 1 : index
    %c0_51 = arith.constant 0 : index
    %c0_52 = arith.constant 0 : index
    %56 = vector.load %arg4[%c0_49, %c1_50, %c0_51, %c0_52] : memref<1x4x32x8xf32, #tpu.memory_space<vmem>>, vector<1x1x32x8xf32>
    %57 = vector.shape_cast %56 : vector<1x1x32x8xf32> to vector<32x8xf32>
    %cst_53 = arith.constant dense<0.000000e+00> : vector<16x8xf32>
    %58 = tpu.matmul %3, %57, %cst_53 {dimension_numbers = #tpu.dot_dimension_numbers<[1], [0], [0], [1], [0, 0, 1, 1], [], []>} : vector<16x32xf32>, vector<32x8xf32>, vector<16x8xf32> -> vector<16x8xf32>
    %c0_54 = arith.constant 0 : index
    %c1_55 = arith.constant 1 : index
    %c0_56 = arith.constant 0 : index
    %c0_57 = arith.constant 0 : index
    %59 = vector.load %arg7[%c0_54, %c1_55, %c0_56, %c0_57] : memref<1x4x1x8xf32, #tpu.memory_space<vmem>>, vector<1x1x1x8xf32>
    %60 = vector.shape_cast %59 : vector<1x1x1x8xf32> to vector<1x8xf32>
    %61 = vector.broadcast %60 : vector<1x8xf32> to vector<16x8xf32>
    %62 = arith.addf %58, %61 : vector<16x8xf32>
    %c0_58 = arith.constant 0 : index
    %c1_59 = arith.constant 1 : index
    %c0_60 = arith.constant 0 : index
    %c0_61 = arith.constant 0 : index
    %63 = vector.load %arg5[%c0_58, %c1_59, %c0_60, %c0_61] : memref<1x4x32x8xf32, #tpu.memory_space<vmem>>, vector<1x1x32x8xf32>
    %64 = vector.shape_cast %63 : vector<1x1x32x8xf32> to vector<32x8xf32>
    %cst_62 = arith.constant dense<0.000000e+00> : vector<16x8xf32>
    %65 = tpu.matmul %3, %64, %cst_62 {dimension_numbers = #tpu.dot_dimension_numbers<[1], [0], [0], [1], [0, 0, 1, 1], [], []>} : vector<16x32xf32>, vector<32x8xf32>, vector<16x8xf32> -> vector<16x8xf32>
    %c0_63 = arith.constant 0 : index
    %c1_64 = arith.constant 1 : index
    %c0_65 = arith.constant 0 : index
    %c0_66 = arith.constant 0 : index
    %66 = vector.load %arg8[%c0_63, %c1_64, %c0_65, %c0_66] : memref<1x4x1x8xf32, #tpu.memory_space<vmem>>, vector<1x1x1x8xf32>
    %67 = vector.shape_cast %66 : vector<1x1x1x8xf32> to vector<1x8xf32>
    %68 = vector.broadcast %67 : vector<1x8xf32> to vector<16x8xf32>
    %69 = arith.addf %65, %68 : vector<16x8xf32>
    %70 = vector.shape_cast %55 : vector<16x8xf32> to vector<2x8x8xf32>
    %71 = vector.shape_cast %62 : vector<16x8xf32> to vector<2x8x8xf32>
    %72 = vector.shape_cast %69 : vector<16x8xf32> to vector<2x8x8xf32>
    "tpu.trace_start"() <{level = 10 : i32, message = "bqd,bkd->bqk"}> : () -> ()
    %cst_67 = arith.constant dense<0.000000e+00> : vector<2x8x8xf32>
    %73 = tpu.matmul %70, %71, %cst_67 {dimension_numbers = #tpu.dot_dimension_numbers<[2], [2], [1], [1], [0, 0, 0, 1, 1, 1], [0], [0]>} : vector<2x8x8xf32>, vector<2x8x8xf32>, vector<2x8x8xf32> -> vector<2x8x8xf32>
    "tpu.trace_stop"() : () -> ()
    %cst_68 = arith.constant 0.353553385 : f32
    %74 = vector.broadcast %cst_68 : f32 to vector<2x8x8xf32>
    %75 = arith.mulf %73, %74 : vector<2x8x8xf32>
    %76 = vector.broadcast %4 : vector<2x1x8xf32> to vector<2x8x8xf32>
    %77 = arith.addf %75, %76 : vector<2x8x8xf32>
    %cst_69 = arith.constant dense<0xFF800000> : vector<2x8xf32>
    %78 = vector.multi_reduction <maximumf>, %77, %cst_69 [2] : vector<2x8x8xf32> to vector<2x8xf32>
    %79 = vector.shape_cast %78 : vector<2x8xf32> to vector<2x8x1xf32>
    %80 = vector.broadcast %79 : vector<2x8x1xf32> to vector<2x8x8xf32>
    %81 = arith.subf %77, %80 : vector<2x8x8xf32>
    %82 = math.exp %81 : vector<2x8x8xf32>
    %cst_70 = arith.constant dense<0.000000e+00> : vector<2x8xf32>
    %83 = vector.multi_reduction <add>, %82, %cst_70 [2] : vector<2x8x8xf32> to vector<2x8xf32>
    %84 = vector.shape_cast %83 : vector<2x8xf32> to vector<2x8x1xf32>
    %85 = tpu.reciprocal %84 {approx = true} : vector<2x8x1xf32> -> vector<2x8x1xf32>
    %86 = vector.broadcast %85 : vector<2x8x1xf32> to vector<2x8x8xf32>
    %87 = arith.mulf %82, %86 : vector<2x8x8xf32>
    "tpu.trace_start"() <{level = 10 : i32, message = "bqk,bkd->bqd"}> : () -> ()
    %cst_71 = arith.constant dense<0.000000e+00> : vector<2x8x8xf32>
    %88 = tpu.matmul %87, %72, %cst_71 {dimension_numbers = #tpu.dot_dimension_numbers<[2], [1], [1], [2], [0, 0, 0, 1, 1, 2], [0], [0]>} : vector<2x8x8xf32>, vector<2x8x8xf32>, vector<2x8x8xf32> -> vector<2x8x8xf32>
    "tpu.trace_stop"() : () -> ()
    %89 = vector.shape_cast %88 : vector<2x8x8xf32> to vector<16x8xf32>
    %c0_72 = arith.constant 0 : index
    %c1_73 = arith.constant 1 : index
    %c0_74 = arith.constant 0 : index
    %c0_75 = arith.constant 0 : index
    %90 = vector.load %arg9[%c0_72, %c1_73, %c0_74, %c0_75] : memref<1x4x8x32xf32, #tpu.memory_space<vmem>>, vector<1x1x8x32xf32>
    %91 = vector.shape_cast %90 : vector<1x1x8x32xf32> to vector<8x32xf32>
    %cst_76 = arith.constant dense<0.000000e+00> : vector<16x32xf32>
    %92 = tpu.matmul %89, %91, %cst_76 {dimension_numbers = #tpu.dot_dimension_numbers<[1], [0], [0], [1], [0, 0, 1, 1], [], []>} : vector<16x8xf32>, vector<8x32xf32>, vector<16x32xf32> -> vector<16x32xf32>
    %93 = arith.addf %48, %92 : vector<16x32xf32>
    %c0_77 = arith.constant 0 : index
    %c2 = arith.constant 2 : index
    %c0_78 = arith.constant 0 : index
    %c0_79 = arith.constant 0 : index
    %94 = vector.load %arg3[%c0_77, %c2, %c0_78, %c0_79] : memref<1x4x32x8xf32, #tpu.memory_space<vmem>>, vector<1x1x32x8xf32>
    %95 = vector.shape_cast %94 : vector<1x1x32x8xf32> to vector<32x8xf32>
    %cst_80 = arith.constant dense<0.000000e+00> : vector<16x8xf32>
    %96 = tpu.matmul %3, %95, %cst_80 {dimension_numbers = #tpu.dot_dimension_numbers<[1], [0], [0], [1], [0, 0, 1, 1], [], []>} : vector<16x32xf32>, vector<32x8xf32>, vector<16x8xf32> -> vector<16x8xf32>
    %c0_81 = arith.constant 0 : index
    %c2_82 = arith.constant 2 : index
    %c0_83 = arith.constant 0 : index
    %c0_84 = arith.constant 0 : index
    %97 = vector.load %arg6[%c0_81, %c2_82, %c0_83, %c0_84] : memref<1x4x1x8xf32, #tpu.memory_space<vmem>>, vector<1x1x1x8xf32>
    %98 = vector.shape_cast %97 : vector<1x1x1x8xf32> to vector<1x8xf32>
    %99 = vector.broadcast %98 : vector<1x8xf32> to vector<16x8xf32>
    %100 = arith.addf %96, %99 : vector<16x8xf32>
    %c0_85 = arith.constant 0 : index
    %c2_86 = arith.constant 2 : index
    %c0_87 = arith.constant 0 : index
    %c0_88 = arith.constant 0 : index
    %101 = vector.load %arg4[%c0_85, %c2_86, %c0_87, %c0_88] : memref<1x4x32x8xf32, #tpu.memory_space<vmem>>, vector<1x1x32x8xf32>
    %102 = vector.shape_cast %101 : vector<1x1x32x8xf32> to vector<32x8xf32>
    %cst_89 = arith.constant dense<0.000000e+00> : vector<16x8xf32>
    %103 = tpu.matmul %3, %102, %cst_89 {dimension_numbers = #tpu.dot_dimension_numbers<[1], [0], [0], [1], [0, 0, 1, 1], [], []>} : vector<16x32xf32>, vector<32x8xf32>, vector<16x8xf32> -> vector<16x8xf32>
    %c0_90 = arith.constant 0 : index
    %c2_91 = arith.constant 2 : index
    %c0_92 = arith.constant 0 : index
    %c0_93 = arith.constant 0 : index
    %104 = vector.load %arg7[%c0_90, %c2_91, %c0_92, %c0_93] : memref<1x4x1x8xf32, #tpu.memory_space<vmem>>, vector<1x1x1x8xf32>
    %105 = vector.shape_cast %104 : vector<1x1x1x8xf32> to vector<1x8xf32>
    %106 = vector.broadcast %105 : vector<1x8xf32> to vector<16x8xf32>
    %107 = arith.addf %103, %106 : vector<16x8xf32>
    %c0_94 = arith.constant 0 : index
    %c2_95 = arith.constant 2 : index
    %c0_96 = arith.constant 0 : index
    %c0_97 = arith.constant 0 : index
    %108 = vector.load %arg5[%c0_94, %c2_95, %c0_96, %c0_97] : memref<1x4x32x8xf32, #tpu.memory_space<vmem>>, vector<1x1x32x8xf32>
    %109 = vector.shape_cast %108 : vector<1x1x32x8xf32> to vector<32x8xf32>
    %cst_98 = arith.constant dense<0.000000e+00> : vector<16x8xf32>
    %110 = tpu.matmul %3, %109, %cst_98 {dimension_numbers = #tpu.dot_dimension_numbers<[1], [0], [0], [1], [0, 0, 1, 1], [], []>} : vector<16x32xf32>, vector<32x8xf32>, vector<16x8xf32> -> vector<16x8xf32>
    %c0_99 = arith.constant 0 : index
    %c2_100 = arith.constant 2 : index
    %c0_101 = arith.constant 0 : index
    %c0_102 = arith.constant 0 : index
    %111 = vector.load %arg8[%c0_99, %c2_100, %c0_101, %c0_102] : memref<1x4x1x8xf32, #tpu.memory_space<vmem>>, vector<1x1x1x8xf32>
    %112 = vector.shape_cast %111 : vector<1x1x1x8xf32> to vector<1x8xf32>
    %113 = vector.broadcast %112 : vector<1x8xf32> to vector<16x8xf32>
    %114 = arith.addf %110, %113 : vector<16x8xf32>
    %115 = vector.shape_cast %100 : vector<16x8xf32> to vector<2x8x8xf32>
    %116 = vector.shape_cast %107 : vector<16x8xf32> to vector<2x8x8xf32>
    %117 = vector.shape_cast %114 : vector<16x8xf32> to vector<2x8x8xf32>
    "tpu.trace_start"() <{level = 10 : i32, message = "bqd,bkd->bqk"}> : () -> ()
    %cst_103 = arith.constant dense<0.000000e+00> : vector<2x8x8xf32>
    %118 = tpu.matmul %115, %116, %cst_103 {dimension_numbers = #tpu.dot_dimension_numbers<[2], [2], [1], [1], [0, 0, 0, 1, 1, 1], [0], [0]>} : vector<2x8x8xf32>, vector<2x8x8xf32>, vector<2x8x8xf32> -> vector<2x8x8xf32>
    "tpu.trace_stop"() : () -> ()
    %cst_104 = arith.constant 0.353553385 : f32
    %119 = vector.broadcast %cst_104 : f32 to vector<2x8x8xf32>
    %120 = arith.mulf %118, %119 : vector<2x8x8xf32>
    %121 = vector.broadcast %4 : vector<2x1x8xf32> to vector<2x8x8xf32>
    %122 = arith.addf %120, %121 : vector<2x8x8xf32>
    %cst_105 = arith.constant dense<0xFF800000> : vector<2x8xf32>
    %123 = vector.multi_reduction <maximumf>, %122, %cst_105 [2] : vector<2x8x8xf32> to vector<2x8xf32>
    %124 = vector.shape_cast %123 : vector<2x8xf32> to vector<2x8x1xf32>
    %125 = vector.broadcast %124 : vector<2x8x1xf32> to vector<2x8x8xf32>
    %126 = arith.subf %122, %125 : vector<2x8x8xf32>
    %127 = math.exp %126 : vector<2x8x8xf32>
    %cst_106 = arith.constant dense<0.000000e+00> : vector<2x8xf32>
    %128 = vector.multi_reduction <add>, %127, %cst_106 [2] : vector<2x8x8xf32> to vector<2x8xf32>
    %129 = vector.shape_cast %128 : vector<2x8xf32> to vector<2x8x1xf32>
    %130 = tpu.reciprocal %129 {approx = true} : vector<2x8x1xf32> -> vector<2x8x1xf32>
    %131 = vector.broadcast %130 : vector<2x8x1xf32> to vector<2x8x8xf32>
    %132 = arith.mulf %127, %131 : vector<2x8x8xf32>
    "tpu.trace_start"() <{level = 10 : i32, message = "bqk,bkd->bqd"}> : () -> ()
    %cst_107 = arith.constant dense<0.000000e+00> : vector<2x8x8xf32>
    %133 = tpu.matmul %132, %117, %cst_107 {dimension_numbers = #tpu.dot_dimension_numbers<[2], [1], [1], [2], [0, 0, 0, 1, 1, 2], [0], [0]>} : vector<2x8x8xf32>, vector<2x8x8xf32>, vector<2x8x8xf32> -> vector<2x8x8xf32>
    "tpu.trace_stop"() : () -> ()
    %134 = vector.shape_cast %133 : vector<2x8x8xf32> to vector<16x8xf32>
    %c0_108 = arith.constant 0 : index
    %c2_109 = arith.constant 2 : index
    %c0_110 = arith.constant 0 : index
    %c0_111 = arith.constant 0 : index
    %135 = vector.load %arg9[%c0_108, %c2_109, %c0_110, %c0_111] : memref<1x4x8x32xf32, #tpu.memory_space<vmem>>, vector<1x1x8x32xf32>
    %136 = vector.shape_cast %135 : vector<1x1x8x32xf32> to vector<8x32xf32>
    %cst_112 = arith.constant dense<0.000000e+00> : vector<16x32xf32>
    %137 = tpu.matmul %134, %136, %cst_112 {dimension_numbers = #tpu.dot_dimension_numbers<[1], [0], [0], [1], [0, 0, 1, 1], [], []>} : vector<16x8xf32>, vector<8x32xf32>, vector<16x32xf32> -> vector<16x32xf32>
    %138 = arith.addf %93, %137 : vector<16x32xf32>
    %c0_113 = arith.constant 0 : index
    %c3 = arith.constant 3 : index
    %c0_114 = arith.constant 0 : index
    %c0_115 = arith.constant 0 : index
    %139 = vector.load %arg3[%c0_113, %c3, %c0_114, %c0_115] : memref<1x4x32x8xf32, #tpu.memory_space<vmem>>, vector<1x1x32x8xf32>
    %140 = vector.shape_cast %139 : vector<1x1x32x8xf32> to vector<32x8xf32>
    %cst_116 = arith.constant dense<0.000000e+00> : vector<16x8xf32>
    %141 = tpu.matmul %3, %140, %cst_116 {dimension_numbers = #tpu.dot_dimension_numbers<[1], [0], [0], [1], [0, 0, 1, 1], [], []>} : vector<16x32xf32>, vector<32x8xf32>, vector<16x8xf32> -> vector<16x8xf32>
    %c0_117 = arith.constant 0 : index
    %c3_118 = arith.constant 3 : index
    %c0_119 = arith.constant 0 : index
    %c0_120 = arith.constant 0 : index
    %142 = vector.load %arg6[%c0_117, %c3_118, %c0_119, %c0_120] : memref<1x4x1x8xf32, #tpu.memory_space<vmem>>, vector<1x1x1x8xf32>
    %143 = vector.shape_cast %142 : vector<1x1x1x8xf32> to vector<1x8xf32>
    %144 = vector.broadcast %143 : vector<1x8xf32> to vector<16x8xf32>
    %145 = arith.addf %141, %144 : vector<16x8xf32>
    %c0_121 = arith.constant 0 : index
    %c3_122 = arith.constant 3 : index
    %c0_123 = arith.constant 0 : index
    %c0_124 = arith.constant 0 : index
    %146 = vector.load %arg4[%c0_121, %c3_122, %c0_123, %c0_124] : memref<1x4x32x8xf32, #tpu.memory_space<vmem>>, vector<1x1x32x8xf32>
    %147 = vector.shape_cast %146 : vector<1x1x32x8xf32> to vector<32x8xf32>
    %cst_125 = arith.constant dense<0.000000e+00> : vector<16x8xf32>
    %148 = tpu.matmul %3, %147, %cst_125 {dimension_numbers = #tpu.dot_dimension_numbers<[1], [0], [0], [1], [0, 0, 1, 1], [], []>} : vector<16x32xf32>, vector<32x8xf32>, vector<16x8xf32> -> vector<16x8xf32>
    %c0_126 = arith.constant 0 : index
    %c3_127 = arith.constant 3 : index
    %c0_128 = arith.constant 0 : index
    %c0_129 = arith.constant 0 : index
    %149 = vector.load %arg7[%c0_126, %c3_127, %c0_128, %c0_129] : memref<1x4x1x8xf32, #tpu.memory_space<vmem>>, vector<1x1x1x8xf32>
    %150 = vector.shape_cast %149 : vector<1x1x1x8xf32> to vector<1x8xf32>
    %151 = vector.broadcast %150 : vector<1x8xf32> to vector<16x8xf32>
    %152 = arith.addf %148, %151 : vector<16x8xf32>
    %c0_130 = arith.constant 0 : index
    %c3_131 = arith.constant 3 : index
    %c0_132 = arith.constant 0 : index
    %c0_133 = arith.constant 0 : index
    %153 = vector.load %arg5[%c0_130, %c3_131, %c0_132, %c0_133] : memref<1x4x32x8xf32, #tpu.memory_space<vmem>>, vector<1x1x32x8xf32>
    %154 = vector.shape_cast %153 : vector<1x1x32x8xf32> to vector<32x8xf32>
    %cst_134 = arith.constant dense<0.000000e+00> : vector<16x8xf32>
    %155 = tpu.matmul %3, %154, %cst_134 {dimension_numbers = #tpu.dot_dimension_numbers<[1], [0], [0], [1], [0, 0, 1, 1], [], []>} : vector<16x32xf32>, vector<32x8xf32>, vector<16x8xf32> -> vector<16x8xf32>
    %c0_135 = arith.constant 0 : index
    %c3_136 = arith.constant 3 : index
    %c0_137 = arith.constant 0 : index
    %c0_138 = arith.constant 0 : index
    %156 = vector.load %arg8[%c0_135, %c3_136, %c0_137, %c0_138] : memref<1x4x1x8xf32, #tpu.memory_space<vmem>>, vector<1x1x1x8xf32>
    %157 = vector.shape_cast %156 : vector<1x1x1x8xf32> to vector<1x8xf32>
    %158 = vector.broadcast %157 : vector<1x8xf32> to vector<16x8xf32>
    %159 = arith.addf %155, %158 : vector<16x8xf32>
    %160 = vector.shape_cast %145 : vector<16x8xf32> to vector<2x8x8xf32>
    %161 = vector.shape_cast %152 : vector<16x8xf32> to vector<2x8x8xf32>
    %162 = vector.shape_cast %159 : vector<16x8xf32> to vector<2x8x8xf32>
    "tpu.trace_start"() <{level = 10 : i32, message = "bqd,bkd->bqk"}> : () -> ()
    %cst_139 = arith.constant dense<0.000000e+00> : vector<2x8x8xf32>
    %163 = tpu.matmul %160, %161, %cst_139 {dimension_numbers = #tpu.dot_dimension_numbers<[2], [2], [1], [1], [0, 0, 0, 1, 1, 1], [0], [0]>} : vector<2x8x8xf32>, vector<2x8x8xf32>, vector<2x8x8xf32> -> vector<2x8x8xf32>
    "tpu.trace_stop"() : () -> ()
    %cst_140 = arith.constant 0.353553385 : f32
    %164 = vector.broadcast %cst_140 : f32 to vector<2x8x8xf32>
    %165 = arith.mulf %163, %164 : vector<2x8x8xf32>
    %166 = vector.broadcast %4 : vector<2x1x8xf32> to vector<2x8x8xf32>
    %167 = arith.addf %165, %166 : vector<2x8x8xf32>
    %cst_141 = arith.constant dense<0xFF800000> : vector<2x8xf32>
    %168 = vector.multi_reduction <maximumf>, %167, %cst_141 [2] : vector<2x8x8xf32> to vector<2x8xf32>
    %169 = vector.shape_cast %168 : vector<2x8xf32> to vector<2x8x1xf32>
    %170 = vector.broadcast %169 : vector<2x8x1xf32> to vector<2x8x8xf32>
    %171 = arith.subf %167, %170 : vector<2x8x8xf32>
    %172 = math.exp %171 : vector<2x8x8xf32>
    %cst_142 = arith.constant dense<0.000000e+00> : vector<2x8xf32>
    %173 = vector.multi_reduction <add>, %172, %cst_142 [2] : vector<2x8x8xf32> to vector<2x8xf32>
    %174 = vector.shape_cast %173 : vector<2x8xf32> to vector<2x8x1xf32>
    %175 = tpu.reciprocal %174 {approx = true} : vector<2x8x1xf32> -> vector<2x8x1xf32>
    %176 = vector.broadcast %175 : vector<2x8x1xf32> to vector<2x8x8xf32>
    %177 = arith.mulf %172, %176 : vector<2x8x8xf32>
    "tpu.trace_start"() <{level = 10 : i32, message = "bqk,bkd->bqd"}> : () -> ()
    %cst_143 = arith.constant dense<0.000000e+00> : vector<2x8x8xf32>
    %178 = tpu.matmul %177, %162, %cst_143 {dimension_numbers = #tpu.dot_dimension_numbers<[2], [1], [1], [2], [0, 0, 0, 1, 1, 2], [0], [0]>} : vector<2x8x8xf32>, vector<2x8x8xf32>, vector<2x8x8xf32> -> vector<2x8x8xf32>
    "tpu.trace_stop"() : () -> ()
    %179 = vector.shape_cast %178 : vector<2x8x8xf32> to vector<16x8xf32>
    %c0_144 = arith.constant 0 : index
    %c3_145 = arith.constant 3 : index
    %c0_146 = arith.constant 0 : index
    %c0_147 = arith.constant 0 : index
    %180 = vector.load %arg9[%c0_144, %c3_145, %c0_146, %c0_147] : memref<1x4x8x32xf32, #tpu.memory_space<vmem>>, vector<1x1x8x32xf32>
    %181 = vector.shape_cast %180 : vector<1x1x8x32xf32> to vector<8x32xf32>
    %cst_148 = arith.constant dense<0.000000e+00> : vector<16x32xf32>
    %182 = tpu.matmul %179, %181, %cst_148 {dimension_numbers = #tpu.dot_dimension_numbers<[1], [0], [0], [1], [0, 0, 1, 1], [], []>} : vector<16x8xf32>, vector<8x32xf32>, vector<16x32xf32> -> vector<16x32xf32>
    %183 = arith.addf %138, %182 : vector<16x32xf32>
    %c0_149 = arith.constant 0 : index
    %c0_150 = arith.constant 0 : index
    %c0_151 = arith.constant 0 : index
    %184 = vector.load %arg10[%c0_149, %c0_150, %c0_151] : memref<1x1x32xf32, #tpu.memory_space<vmem>>, vector<1x1x32xf32>
    %185 = vector.shape_cast %184 : vector<1x1x32xf32> to vector<1x32xf32>
    %186 = vector.broadcast %185 : vector<1x32xf32> to vector<16x32xf32>
    %187 = arith.addf %183, %186 : vector<16x32xf32>
    %188 = arith.addf %3, %187 : vector<16x32xf32>
    %cst_152 = arith.constant dense<0.000000e+00> : vector<16xf32>
    %189 = vector.multi_reduction <add>, %188, %cst_152 [1] : vector<16x32xf32> to vector<16xf32>
    %190 = vector.shape_cast %189 : vector<16xf32> to vector<16x1xf32>
    %cst_153 = arith.constant 3.200000e+01 : f32
    %191 = vector.broadcast %cst_153 : f32 to vector<16x1xf32>
    %192 = arith.divf %190, %191 : vector<16x1xf32>
    %193 = vector.broadcast %192 : vector<16x1xf32> to vector<16x32xf32>
    %194 = arith.subf %188, %193 : vector<16x32xf32>
    %195 = vector.broadcast %192 : vector<16x1xf32> to vector<16x32xf32>
    %196 = arith.subf %188, %195 : vector<16x32xf32>
    %197 = arith.mulf %194, %196 : vector<16x32xf32>
    %cst_154 = arith.constant dense<0.000000e+00> : vector<16xf32>
    %198 = vector.multi_reduction <add>, %197, %cst_154 [1] : vector<16x32xf32> to vector<16xf32>
    %199 = vector.shape_cast %198 : vector<16xf32> to vector<16x1xf32>
    %cst_155 = arith.constant 3.200000e+01 : f32
    %200 = vector.broadcast %cst_155 : f32 to vector<16x1xf32>
    %201 = arith.divf %199, %200 : vector<16x1xf32>
    %202 = vector.broadcast %192 : vector<16x1xf32> to vector<16x32xf32>
    %203 = arith.subf %188, %202 : vector<16x32xf32>
    %cst_156 = arith.constant 9.99999974E-6 : f32
    %204 = vector.broadcast %cst_156 : f32 to vector<16x1xf32>
    %205 = arith.addf %201, %204 : vector<16x1xf32>
    %206 = math.rsqrt %205 : vector<16x1xf32>
    %207 = vector.broadcast %206 : vector<16x1xf32> to vector<16x32xf32>
    %208 = arith.mulf %203, %207 : vector<16x32xf32>
    %c0_157 = arith.constant 0 : index
    %c0_158 = arith.constant 0 : index
    %c0_159 = arith.constant 0 : index
    %209 = vector.load %arg11[%c0_157, %c0_158, %c0_159] : memref<1x1x32xf32, #tpu.memory_space<vmem>>, vector<1x1x32xf32>
    %210 = vector.shape_cast %209 : vector<1x1x32xf32> to vector<1x32xf32>
    %211 = vector.broadcast %210 : vector<1x32xf32> to vector<16x32xf32>
    %212 = arith.mulf %208, %211 : vector<16x32xf32>
    %c0_160 = arith.constant 0 : index
    %c0_161 = arith.constant 0 : index
    %c0_162 = arith.constant 0 : index
    %213 = vector.load %arg12[%c0_160, %c0_161, %c0_162] : memref<1x1x32xf32, #tpu.memory_space<vmem>>, vector<1x1x32xf32>
    %214 = vector.shape_cast %213 : vector<1x1x32xf32> to vector<1x32xf32>
    %215 = vector.broadcast %214 : vector<1x32xf32> to vector<16x32xf32>
    %216 = arith.addf %212, %215 : vector<16x32xf32>
    %c0_163 = arith.constant 0 : index
    %c0_164 = arith.constant 0 : index
    %c0_165 = arith.constant 0 : index
    %217 = vector.load %arg15[%c0_163, %c0_164, %c0_165] : memref<1x32x128xf32, #tpu.memory_space<vmem>>, vector<1x32x128xf32>
    %218 = vector.shape_cast %217 : vector<1x32x128xf32> to vector<32x128xf32>
    %cst_166 = arith.constant dense<0.000000e+00> : vector<16x128xf32>
    %219 = tpu.matmul %216, %218, %cst_166 {dimension_numbers = #tpu.dot_dimension_numbers<[1], [0], [0], [1], [0, 0, 1, 1], [], []>} : vector<16x32xf32>, vector<32x128xf32>, vector<16x128xf32> -> vector<16x128xf32>
    %c0_167 = arith.constant 0 : index
    %c0_168 = arith.constant 0 : index
    %c0_169 = arith.constant 0 : index
    %220 = vector.load %arg16[%c0_167, %c0_168, %c0_169] : memref<1x1x128xf32, #tpu.memory_space<vmem>>, vector<1x1x128xf32>
    %221 = vector.shape_cast %220 : vector<1x1x128xf32> to vector<1x128xf32>
    %222 = vector.broadcast %221 : vector<1x128xf32> to vector<16x128xf32>
    %223 = arith.addf %219, %222 : vector<16x128xf32>
    %cst_170 = arith.constant 0.000000e+00 : f32
    %224 = vector.broadcast %cst_170 : f32 to vector<16x128xf32>
    %225 = arith.maximumf %223, %224 : vector<16x128xf32>
    %c0_171 = arith.constant 0 : index
    %c0_172 = arith.constant 0 : index
    %c0_173 = arith.constant 0 : index
    %226 = vector.load %arg17[%c0_171, %c0_172, %c0_173] : memref<1x128x32xf32, #tpu.memory_space<vmem>>, vector<1x128x32xf32>
    %227 = vector.shape_cast %226 : vector<1x128x32xf32> to vector<128x32xf32>
    %cst_174 = arith.constant dense<0.000000e+00> : vector<16x32xf32>
    %228 = tpu.matmul %225, %227, %cst_174 {dimension_numbers = #tpu.dot_dimension_numbers<[1], [0], [0], [1], [0, 0, 1, 1], [], []>} : vector<16x128xf32>, vector<128x32xf32>, vector<16x32xf32> -> vector<16x32xf32>
    %c0_175 = arith.constant 0 : index
    %c0_176 = arith.constant 0 : index
    %c0_177 = arith.constant 0 : index
    %229 = vector.load %arg18[%c0_175, %c0_176, %c0_177] : memref<1x1x32xf32, #tpu.memory_space<vmem>>, vector<1x1x32xf32>
    %230 = vector.shape_cast %229 : vector<1x1x32xf32> to vector<1x32xf32>
    %231 = vector.broadcast %230 : vector<1x32xf32> to vector<16x32xf32>
    %232 = arith.addf %228, %231 : vector<16x32xf32>
    %233 = arith.addf %216, %232 : vector<16x32xf32>
    %cst_178 = arith.constant dense<0.000000e+00> : vector<16xf32>
    %234 = vector.multi_reduction <add>, %233, %cst_178 [1] : vector<16x32xf32> to vector<16xf32>
    %235 = vector.shape_cast %234 : vector<16xf32> to vector<16x1xf32>
    %cst_179 = arith.constant 3.200000e+01 : f32
    %236 = vector.broadcast %cst_179 : f32 to vector<16x1xf32>
    %237 = arith.divf %235, %236 : vector<16x1xf32>
    %238 = vector.broadcast %237 : vector<16x1xf32> to vector<16x32xf32>
    %239 = arith.subf %233, %238 : vector<16x32xf32>
    %240 = vector.broadcast %237 : vector<16x1xf32> to vector<16x32xf32>
    %241 = arith.subf %233, %240 : vector<16x32xf32>
    %242 = arith.mulf %239, %241 : vector<16x32xf32>
    %cst_180 = arith.constant dense<0.000000e+00> : vector<16xf32>
    %243 = vector.multi_reduction <add>, %242, %cst_180 [1] : vector<16x32xf32> to vector<16xf32>
    %244 = vector.shape_cast %243 : vector<16xf32> to vector<16x1xf32>
    %cst_181 = arith.constant 3.200000e+01 : f32
    %245 = vector.broadcast %cst_181 : f32 to vector<16x1xf32>
    %246 = arith.divf %244, %245 : vector<16x1xf32>
    %247 = vector.broadcast %237 : vector<16x1xf32> to vector<16x32xf32>
    %248 = arith.subf %233, %247 : vector<16x32xf32>
    %cst_182 = arith.constant 9.99999974E-6 : f32
    %249 = vector.broadcast %cst_182 : f32 to vector<16x1xf32>
    %250 = arith.addf %246, %249 : vector<16x1xf32>
    %251 = math.rsqrt %250 : vector<16x1xf32>
    %252 = vector.broadcast %251 : vector<16x1xf32> to vector<16x32xf32>
    %253 = arith.mulf %248, %252 : vector<16x32xf32>
    %c0_183 = arith.constant 0 : index
    %c0_184 = arith.constant 0 : index
    %c0_185 = arith.constant 0 : index
    %254 = vector.load %arg13[%c0_183, %c0_184, %c0_185] : memref<1x1x32xf32, #tpu.memory_space<vmem>>, vector<1x1x32xf32>
    %255 = vector.shape_cast %254 : vector<1x1x32xf32> to vector<1x32xf32>
    %256 = vector.broadcast %255 : vector<1x32xf32> to vector<16x32xf32>
    %257 = arith.mulf %253, %256 : vector<16x32xf32>
    %c0_186 = arith.constant 0 : index
    %c0_187 = arith.constant 0 : index
    %c0_188 = arith.constant 0 : index
    %258 = vector.load %arg14[%c0_186, %c0_187, %c0_188] : memref<1x1x32xf32, #tpu.memory_space<vmem>>, vector<1x1x32xf32>
    %259 = vector.shape_cast %258 : vector<1x1x32xf32> to vector<1x32xf32>
    %260 = vector.broadcast %259 : vector<1x32xf32> to vector<16x32xf32>
    %261 = arith.addf %257, %260 : vector<16x32xf32>
    %c0_189 = arith.constant 0 : index
    %c0_190 = arith.constant 0 : index
    %262 = vector.load %arg19[%c0_189, %c0_190] : memref<16x32xf32, #tpu.memory_space<vmem>>, vector<16x32xf32>
    tpu.vector_store %arg19[%c0_189, %c0_190], %261 {strides = array<i32>} : memref<16x32xf32, #tpu.memory_space<vmem>>, vector<16x32xf32>,
    return
  }
  func.func @transform_0(%arg0: i32) -> (i32, i32) {
    %c0_i32 = arith.constant 0 : i32
    %c0_i32_0 = arith.constant 0 : i32
    %c0_i32_1 = arith.constant 0 : i32
    return %c0_i32, %c0_i32_0 : i32, i32
  }
  func.func @transform_1(%arg0: i32) -> (i32, i32, i32) {
    %c0_i32 = arith.constant 0 : i32
    %c0_i32_0 = arith.constant 0 : i32
    %c0_i32_1 = arith.constant 0 : i32
    %c0_i32_2 = arith.constant 0 : i32
    return %c0_i32, %c0_i32_0, %c0_i32_1 : i32, i32, i32
  }
  func.func @transform_2(%arg0: i32) -> (i32, i32, i32, i32) {
    %c0_i32 = arith.constant 0 : i32
    %c0_i32_0 = arith.constant 0 : i32
    %c0_i32_1 = arith.constant 0 : i32
    %c0_i32_2 = arith.constant 0 : i32
    return %arg0, %c0_i32, %c0_i32_0, %c0_i32_1 : i32, i32, i32, i32
  }
  func.func @transform_3(%arg0: i32) -> (i32, i32, i32, i32) {
    %c0_i32 = arith.constant 0 : i32
    %c0_i32_0 = arith.constant 0 : i32
    %c0_i32_1 = arith.constant 0 : i32
    %c0_i32_2 = arith.constant 0 : i32
    return %arg0, %c0_i32, %c0_i32_0, %c0_i32_1 : i32, i32, i32, i32
  }
  func.func @transform_4(%arg0: i32) -> (i32, i32, i32, i32) {
    %c0_i32 = arith.constant 0 : i32
    %c0_i32_0 = arith.constant 0 : i32
    %c0_i32_1 = arith.constant 0 : i32
    %c0_i32_2 = arith.constant 0 : i32
    return %arg0, %c0_i32, %c0_i32_0, %c0_i32_1 : i32, i32, i32, i32
  }
  func.func @transform_5(%arg0: i32) -> (i32, i32, i32, i32) {
    %c0_i32 = arith.constant 0 : i32
    %c0_i32_0 = arith.constant 0 : i32
    %c0_i32_1 = arith.constant 0 : i32
    %c0_i32_2 = arith.constant 0 : i32
    return %arg0, %c0_i32, %c0_i32_0, %c0_i32_1 : i32, i32, i32, i32
  }
  func.func @transform_6(%arg0: i32) -> (i32, i32, i32, i32) {
    %c0_i32 = arith.constant 0 : i32
    %c0_i32_0 = arith.constant 0 : i32
    %c0_i32_1 = arith.constant 0 : i32
    %c0_i32_2 = arith.constant 0 : i32
    return %arg0, %c0_i32, %c0_i32_0, %c0_i32_1 : i32, i32, i32, i32
  }
  func.func @transform_7(%arg0: i32) -> (i32, i32, i32, i32) {
    %c0_i32 = arith.constant 0 : i32
    %c0_i32_0 = arith.constant 0 : i32
    %c0_i32_1 = arith.constant 0 : i32
    %c0_i32_2 = arith.constant 0 : i32
    return %arg0, %c0_i32, %c0_i32_0, %c0_i32_1 : i32, i32, i32, i32
  }
  func.func @transform_8(%arg0: i32) -> (i32, i32, i32, i32) {
    %c0_i32 = arith.constant 0 : i32
    %c0_i32_0 = arith.constant 0 : i32
    %c0_i32_1 = arith.constant 0 : i32
    %c0_i32_2 = arith.constant 0 : i32
    return %arg0, %c0_i32, %c0_i32_0, %c0_i32_1 : i32, i32, i32, i32
  }
  func.func @transform_9(%arg0: i32) -> (i32, i32, i32) {
    %c0_i32 = arith.constant 0 : i32
    %c0_i32_0 = arith.constant 0 : i32
    %c0_i32_1 = arith.constant 0 : i32
    return %arg0, %c0_i32, %c0_i32_0 : i32, i32, i32
  }
  func.func @transform_10(%arg0: i32) -> (i32, i32, i32) {
    %c0_i32 = arith.constant 0 : i32
    %c0_i32_0 = arith.constant 0 : i32
    %c0_i32_1 = arith.constant 0 : i32
    return %arg0, %c0_i32, %c0_i32_0 : i32, i32, i32
  }
  func.func @transform_11(%arg0: i32) -> (i32, i32, i32) {
    %c0_i32 = arith.constant 0 : i32
    %c0_i32_0 = arith.constant 0 : i32
    %c0_i32_1 = arith.constant 0 : i32
    return %arg0, %c0_i32, %c0_i32_0 : i32, i32, i32
  }
  func.func @transform_12(%arg0: i32) -> (i32, i32, i32) {
    %c0_i32 = arith.constant 0 : i32
    %c0_i32_0 = arith.constant 0 : i32
    %c0_i32_1 = arith.constant 0 : i32
    return %arg0, %c0_i32, %c0_i32_0 : i32, i32, i32
  }
  func.func @transform_13(%arg0: i32) -> (i32, i32, i32) {
    %c0_i32 = arith.constant 0 : i32
    %c0_i32_0 = arith.constant 0 : i32
    %c0_i32_1 = arith.constant 0 : i32
    return %arg0, %c0_i32, %c0_i32_0 : i32, i32, i32
  }
  func.func @transform_14(%arg0: i32) -> (i32, i32, i32) {
    %c0_i32 = arith.constant 0 : i32
    %c0_i32_0 = arith.constant 0 : i32
    %c0_i32_1 = arith.constant 0 : i32
    return %arg0, %c0_i32, %c0_i32_0 : i32, i32, i32
  }
  func.func @transform_15(%arg0: i32) -> (i32, i32, i32) {
    %c0_i32 = arith.constant 0 : i32
    %c0_i32_0 = arith.constant 0 : i32
    %c0_i32_1 = arith.constant 0 : i32
    return %arg0, %c0_i32, %c0_i32_0 : i32, i32, i32
  }
  func.func @transform_16(%arg0: i32) -> (i32, i32, i32) {
    %c0_i32 = arith.constant 0 : i32
    %c0_i32_0 = arith.constant 0 : i32
    %c0_i32_1 = arith.constant 0 : i32
    return %arg0, %c0_i32, %c0_i32_0 : i32, i32, i32
  }
  func.func @transform_17(%arg0: i32) -> (i32, i32, i32) {
    %c0_i32 = arith.constant 0 : i32
    %c0_i32_0 = arith.constant 0 : i32
    %c0_i32_1 = arith.constant 0 : i32
    return %arg0, %c0_i32, %c0_i32_0 : i32, i32, i32
  }
  func.func @transform_18(%arg0: i32) -> (i32, i32) {
    %c0_i32 = arith.constant 0 : i32
    %c0_i32_0 = arith.constant 0 : i32
    %c0_i32_1 = arith.constant 0 : i32
    return %c0_i32, %c0_i32_0 : i32, i32
  }
}

</mosaic_0001>

<llo_original>
// kernel: tpu_custom_call.1
$region0: #{tpu_custom_call.1}
  #allocation0 [shape = 'u32[]', space=smem, size = 0x4, offset = 0x4, fixed_abs, tag = 'smem constant byte address 0x4 - core index']
  #allocation1 [shape = 'u32[72,128]{1,0:T(1,128)}', space=vmem, size = 0x9000, scoped, tag = 'internal scratch']
  %s0 = inlined_call_operand.vmem [shape: f32[16,32], index: 0, kind: input, shape index: {}]
  %s1 = inlined_call_operand.vmem [shape: f32[2,1,8], index: 1, kind: input, shape index: {}]
  %s2 = inlined_call_operand.vmem [shape: f32[2,4,32,8], index: 2, kind: input, shape index: {}]
  %s3 = inlined_call_operand.vmem [shape: f32[2,4,32,8], index: 3, kind: input, shape index: {}]
  %s4 = inlined_call_operand.vmem [shape: f32[2,4,32,8], index: 4, kind: input, shape index: {}]
  %s5 = inlined_call_operand.vmem [shape: f32[2,4,1,8], index: 5, kind: input, shape index: {}]
  %s6 = inlined_call_operand.vmem [shape: f32[2,4,1,8], index: 6, kind: input, shape index: {}]
  %s7 = inlined_call_operand.vmem [shape: f32[2,4,1,8], index: 7, kind: input, shape index: {}]
  %s8 = inlined_call_operand.vmem [shape: f32[2,4,8,32], index: 8, kind: input, shape index: {}]
  %s9 = inlined_call_operand.vmem [shape: f32[2,1,32], index: 9, kind: input, shape index: {}]
  %s10 = inlined_call_operand.vmem [shape: f32[2,1,32], index: 10, kind: input, shape index: {}]
  %s11 = inlined_call_operand.vmem [shape: f32[2,1,32], index: 11, kind: input, shape index: {}]
  %s12 = inlined_call_operand.vmem [shape: f32[2,1,32], index: 12, kind: input, shape index: {}]
  %s13 = inlined_call_operand.vmem [shape: f32[2,1,32], index: 13, kind: input, shape index: {}]
  %s14 = inlined_call_operand.vmem [shape: f32[2,32,128], index: 14, kind: input, shape index: {}]
  %s15 = inlined_call_operand.vmem [shape: f32[2,1,128], index: 15, kind: input, shape index: {}]
  %s16 = inlined_call_operand.vmem [shape: f32[2,128,32], index: 16, kind: input, shape index: {}]
  %s17 = inlined_call_operand.vmem [shape: f32[2,1,32], index: 17, kind: input, shape index: {}]
  %s18 = inlined_call_operand.hbm [shape: f32[16,32], index: 18, kind: output, shape index: {}]
  %s19 = sld [smem:[#allocation0]]
  $region109: #{tpu_custom_call.1} parent=0
    _
  %s21 = ssub.s32 1, %s19
  %s22 = scalar_select 0, %s21, %s19
  $region1: #{tpu_custom_call.1} parent=0
    #allocation2 [shape = 'u8[8192]{0}', space=vmem, size = 0x2000, scoped, tag = 'output window, operand 0, single buffered']
    #allocation3 [shape = 's32[2]{0}', space=sflag, size = 0x8, scoped, tag = 'scoped memory for tpu_custom_call.1']
    %23 = vsyncpa [#allocation3], 0
    loop: start=0, step=1, limit=4
    $region2: #{tpu_custom_call.1} parent=1 // loop_pre_header
      _
    $region3: #{tpu_custom_call.1} parent=1 // loop_header
      %s25 = sphi 0, %s29
      %p26 = scmp.ge.s32.totalorder %s25, 4
      %s33 = sphi 0, %s33
      %s35 = sphi 0, %s33
      %s36 = sphi 0, %s35
      %s50 = sphi 0, %s36
      %s54 = sphi 0, %s54
      %s56 = sphi 0, %s54
      %s57 = sphi 0, %s56
      %s71 = sphi 0, %s57
      %s77 = sphi 0, %s79
      %s80 = sphi 0, %s77
      %s81 = sphi 0, %s80
      %s97 = sphi 0, %s81
      %s103 = sphi 0, %s105
      %s106 = sphi 0, %s103
      %s107 = sphi 0, %s106
      %s123 = sphi 0, %s107
      %s129 = sphi 0, %s131
      %s132 = sphi 0, %s129
      %s133 = sphi 0, %s132
      %s149 = sphi 0, %s133
      %s155 = sphi 0, %s157
      %s158 = sphi 0, %s155
      %s159 = sphi 0, %s158
      %s175 = sphi 0, %s159
      %s181 = sphi 0, %s183
      %s184 = sphi 0, %s181
      %s185 = sphi 0, %s184
      %s201 = sphi 0, %s185
      %s207 = sphi 0, %s209
      %s210 = sphi 0, %s207
      %s211 = sphi 0, %s210
      %s227 = sphi 0, %s211
      %s233 = sphi 0, %s235
      %s236 = sphi 0, %s233
      %s237 = sphi 0, %s236
      %s253 = sphi 0, %s237
      %s259 = sphi 0, %s261
      %s262 = sphi 0, %s259
      %s263 = sphi 0, %s262
      %s279 = sphi 0, %s263
      %s285 = sphi 0, %s287
      %s288 = sphi 0, %s285
      %s289 = sphi 0, %s288
      %s305 = sphi 0, %s289
      %s311 = sphi 0, %s313
      %s314 = sphi 0, %s311
      %s315 = sphi 0, %s314
      %s331 = sphi 0, %s315
      %s337 = sphi 0, %s339
      %s340 = sphi 0, %s337
      %s341 = sphi 0, %s340
      %s357 = sphi 0, %s341
      %s363 = sphi 0, %s365
      %s366 = sphi 0, %s363
      %s367 = sphi 0, %s366
      %s383 = sphi 0, %s367
      %s389 = sphi 0, %s391
      %s392 = sphi 0, %s389
      %s393 = sphi 0, %s392
      %s409 = sphi 0, %s393
      %s415 = sphi 0, %s417
      %s418 = sphi 0, %s415
      %s419 = sphi 0, %s418
      %s435 = sphi 0, %s419
      %s441 = sphi 0, %s443
      %s444 = sphi 0, %s441
      %s445 = sphi 0, %s444
      %s461 = sphi 0, %s445
      %s467 = sphi 0, %s469
      %s470 = sphi 0, %s467
      %s471 = sphi 0, %s470
      %s487 = sphi 0, %s471
      %s491 = sphi 0, %s491
      %s493 = sphi 0, %s491
      %s494 = sphi 0, %s493
      %s508 = sphi 0, %s494
    $region4: #{tpu_custom_call.1} parent=1 // loop_header_branch
      %28 = sbr.rel (%p26) target = $region8
    $region5: #{tpu_custom_call.1} parent=1 // loop_body
      %s30 = ssub.s32 %s25, 1
      %s31 = ssub.s32 %s25, 2
      %s32 = sadd.s32 %s25, 1
      %s34 = sadd.s32 %s33, 1
      %p37 = scmp.eq.s32.totalorder %s25, 1
      %p38 = scmp.ne.s32.totalorder %s33, %s35
      %p39 = scmp.eq.s32.totalorder %s25, 0
      %p40 = por %p38, %p39
      %p41 = scmp.ne.s32.totalorder %s33, %s35
      %p42 = scmp.eq.s32.totalorder %s30, 1
      %p43 = por %p41, %p42
      %p44 = scmp.ne.s32.totalorder %s35, %s36
      %p45 = scmp.eq.s32.totalorder %s30, 0
      %p46 = por %p44, %p45
      %p47 = scmp.ne.s32.totalorder %s35, %s36
      %p48 = scmp.eq.s32.totalorder %s31, 1
      %p49 = por %p47, %p48
      %p51 = scmp.ne.s32.totalorder %s36, %s50
      %p52 = scmp.eq.s32.totalorder %s31, 0
      %p53 = por %p51, %p52
      %s55 = sadd.s32 %s54, 1
      %p58 = scmp.eq.s32.totalorder %s25, 1
      %p59 = scmp.ne.s32.totalorder %s54, %s56
      %p60 = scmp.eq.s32.totalorder %s25, 0
      %p61 = por %p59, %p60
      %p62 = scmp.ne.s32.totalorder %s54, %s56
      %p63 = scmp.eq.s32.totalorder %s30, 1
      %p64 = por %p62, %p63
      %p65 = scmp.ne.s32.totalorder %s56, %s57
      %p66 = scmp.eq.s32.totalorder %s30, 0
      %p67 = por %p65, %p66
      %p68 = scmp.ne.s32.totalorder %s56, %s57
      %p69 = scmp.eq.s32.totalorder %s31, 1
      %p70 = por %p68, %p69
      %p72 = scmp.ne.s32.totalorder %s57, %s71
      %p73 = scmp.eq.s32.totalorder %s31, 0
      %p74 = por %p72, %p73
      %s75 = ssub.s32 %s25, %s32
      %p76 = scmp.eq.s32.totalorder %s75, 0
      %s78 = sadd.s32 %s77, 1
      %s79 = scalar_select %p76, %s77, %s78
      %p82 = pneg %p76
      %p83 = scmp.eq.s32.totalorder %s25, 1
      %p84 = por %p82, %p83
      %p85 = scmp.ne.s32.totalorder %s77, %s80
      %p86 = scmp.eq.s32.totalorder %s25, 0
      %p87 = por %p85, %p86
      %p88 = scmp.ne.s32.totalorder %s77, %s80
      %p89 = scmp.eq.s32.totalorder %s30, 1
      %p90 = por %p88, %p89
      %p91 = scmp.ne.s32.totalorder %s80, %s81
      %p92 = scmp.eq.s32.totalorder %s30, 0
      %p93 = por %p91, %p92
      %p94 = scmp.ne.s32.totalorder %s80, %s81
      %p95 = scmp.eq.s32.totalorder %s31, 1
      %p96 = por %p94, %p95
      %p98 = scmp.ne.s32.totalorder %s81, %s97
      %p99 = scmp.eq.s32.totalorder %s31, 0
      %p100 = por %p98, %p99
      %s101 = ssub.s32 %s25, %s32
      %p102 = scmp.eq.s32.totalorder %s101, 0
      %s104 = sadd.s32 %s103, 1
      %s105 = scalar_select %p102, %s103, %s104
      %p108 = pneg %p102
      %p109 = scmp.eq.s32.totalorder %s25, 1
      %p110 = por %p108, %p109
      %p111 = scmp.ne.s32.totalorder %s103, %s106
      %p112 = scmp.eq.s32.totalorder %s25, 0
      %p113 = por %p111, %p112
      %p114 = scmp.ne.s32.totalorder %s103, %s106
      %p115 = scmp.eq.s32.totalorder %s30, 1
      %p116 = por %p114, %p115
      %p117 = scmp.ne.s32.totalorder %s106, %s107
      %p118 = scmp.eq.s32.totalorder %s30, 0
      %p119 = por %p117, %p118
      %p120 = scmp.ne.s32.totalorder %s106, %s107
      %p121 = scmp.eq.s32.totalorder %s31, 1
      %p122 = por %p120, %p121
      %p124 = scmp.ne.s32.totalorder %s107, %s123
      %p125 = scmp.eq.s32.totalorder %s31, 0
      %p126 = por %p124, %p125
      %s127 = ssub.s32 %s25, %s32
      %p128 = scmp.eq.s32.totalorder %s127, 0
      %s130 = sadd.s32 %s129, 1
      %s131 = scalar_select %p128, %s129, %s130
      %p134 = pneg %p128
      %p135 = scmp.eq.s32.totalorder %s25, 1
      %p136 = por %p134, %p135
      %p137 = scmp.ne.s32.totalorder %s129, %s132
      %p138 = scmp.eq.s32.totalorder %s25, 0
      %p139 = por %p137, %p138
      %p140 = scmp.ne.s32.totalorder %s129, %s132
      %p141 = scmp.eq.s32.totalorder %s30, 1
      %p142 = por %p140, %p141
      %p143 = scmp.ne.s32.totalorder %s132, %s133
      %p144 = scmp.eq.s32.totalorder %s30, 0
      %p145 = por %p143, %p144
      %p146 = scmp.ne.s32.totalorder %s132, %s133
      %p147 = scmp.eq.s32.totalorder %s31, 1
      %p148 = por %p146, %p147
      %p150 = scmp.ne.s32.totalorder %s133, %s149
      %p151 = scmp.eq.s32.totalorder %s31, 0
      %p152 = por %p150, %p151
      %s153 = ssub.s32 %s25, %s32
      %p154 = scmp.eq.s32.totalorder %s153, 0
      %s156 = sadd.s32 %s155, 1
      %s157 = scalar_select %p154, %s155, %s156
      %p160 = pneg %p154
      %p161 = scmp.eq.s32.totalorder %s25, 1
      %p162 = por %p160, %p161
      %p163 = scmp.ne.s32.totalorder %s155, %s158
      %p164 = scmp.eq.s32.totalorder %s25, 0
      %p165 = por %p163, %p164
      %p166 = scmp.ne.s32.totalorder %s155, %s158
      %p167 = scmp.eq.s32.totalorder %s30, 1
      %p168 = por %p166, %p167
      %p169 = scmp.ne.s32.totalorder %s158, %s159
      %p170 = scmp.eq.s32.totalorder %s30, 0
      %p171 = por %p169, %p170
      %p172 = scmp.ne.s32.totalorder %s158, %s159
      %p173 = scmp.eq.s32.totalorder %s31, 1
      %p174 = por %p172, %p173
      %p176 = scmp.ne.s32.totalorder %s159, %s175
      %p177 = scmp.eq.s32.totalorder %s31, 0
      %p178 = por %p176, %p177
      %s179 = ssub.s32 %s25, %s32
      %p180 = scmp.eq.s32.totalorder %s179, 0
      %s182 = sadd.s32 %s181, 1
      %s183 = scalar_select %p180, %s181, %s182
      %p186 = pneg %p180
      %p187 = scmp.eq.s32.totalorder %s25, 1
      %p188 = por %p186, %p187
      %p189 = scmp.ne.s32.totalorder %s181, %s184
      %p190 = scmp.eq.s32.totalorder %s25, 0
      %p191 = por %p189, %p190
      %p192 = scmp.ne.s32.totalorder %s181, %s184
      %p193 = scmp.eq.s32.totalorder %s30, 1
      %p194 = por %p192, %p193
      %p195 = scmp.ne.s32.totalorder %s184, %s185
      %p196 = scmp.eq.s32.totalorder %s30, 0
      %p197 = por %p195, %p196
      %p198 = scmp.ne.s32.totalorder %s184, %s185
      %p199 = scmp.eq.s32.totalorder %s31, 1
      %p200 = por %p198, %p199
      %p202 = scmp.ne.s32.totalorder %s185, %s201
      %p203 = scmp.eq.s32.totalorder %s31, 0
      %p204 = por %p202, %p203
      %s205 = ssub.s32 %s25, %s32
      %p206 = scmp.eq.s32.totalorder %s205, 0
      %s208 = sadd.s32 %s207, 1
      %s209 = scalar_select %p206, %s207, %s208
      %p212 = pneg %p206
      %p213 = scmp.eq.s32.totalorder %s25, 1
      %p214 = por %p212, %p213
      %p215 = scmp.ne.s32.totalorder %s207, %s210
      %p216 = scmp.eq.s32.totalorder %s25, 0
      %p217 = por %p215, %p216
      %p218 = scmp.ne.s32.totalorder %s207, %s210
      %p219 = scmp.eq.s32.totalorder %s30, 1
      %p220 = por %p218, %p219
      %p221 = scmp.ne.s32.totalorder %s210, %s211
      %p222 = scmp.eq.s32.totalorder %s30, 0
      %p223 = por %p221, %p222
      %p224 = scmp.ne.s32.totalorder %s210, %s211
      %p225 = scmp.eq.s32.totalorder %s31, 1
      %p226 = por %p224, %p225
      %p228 = scmp.ne.s32.totalorder %s211, %s227
      %p229 = scmp.eq.s32.totalorder %s31, 0
      %p230 = por %p228, %p229
      %s231 = ssub.s32 %s25, %s32
      %p232 = scmp.eq.s32.totalorder %s231, 0
      %s234 = sadd.s32 %s233, 1
      %s235 = scalar_select %p232, %s233, %s234
      %p238 = pneg %p232
      %p239 = scmp.eq.s32.totalorder %s25, 1
      %p240 = por %p238, %p239
      %p241 = scmp.ne.s32.totalorder %s233, %s236
      %p242 = scmp.eq.s32.totalorder %s25, 0
      %p243 = por %p241, %p242
      %p244 = scmp.ne.s32.totalorder %s233, %s236
      %p245 = scmp.eq.s32.totalorder %s30, 1
      %p246 = por %p244, %p245
      %p247 = scmp.ne.s32.totalorder %s236, %s237
      %p248 = scmp.eq.s32.totalorder %s30, 0
      %p249 = por %p247, %p248
      %p250 = scmp.ne.s32.totalorder %s236, %s237
      %p251 = scmp.eq.s32.totalorder %s31, 1
      %p252 = por %p250, %p251
      %p254 = scmp.ne.s32.totalorder %s237, %s253
      %p255 = scmp.eq.s32.totalorder %s31, 0
      %p256 = por %p254, %p255
      %s257 = ssub.s32 %s25, %s32
      %p258 = scmp.eq.s32.totalorder %s257, 0
      %s260 = sadd.s32 %s259, 1
      %s261 = scalar_select %p258, %s259, %s260
      %p264 = pneg %p258
      %p265 = scmp.eq.s32.totalorder %s25, 1
      %p266 = por %p264, %p265
      %p267 = scmp.ne.s32.totalorder %s259, %s262
      %p268 = scmp.eq.s32.totalorder %s25, 0
      %p269 = por %p267, %p268
      %p270 = scmp.ne.s32.totalorder %s259, %s262
      %p271 = scmp.eq.s32.totalorder %s30, 1
      %p272 = por %p270, %p271
      %p273 = scmp.ne.s32.totalorder %s262, %s263
      %p274 = scmp.eq.s32.totalorder %s30, 0
      %p275 = por %p273, %p274
      %p276 = scmp.ne.s32.totalorder %s262, %s263
      %p277 = scmp.eq.s32.totalorder %s31, 1
      %p278 = por %p276, %p277
      %p280 = scmp.ne.s32.totalorder %s263, %s279
      %p281 = scmp.eq.s32.totalorder %s31, 0
      %p282 = por %p280, %p281
      %s283 = ssub.s32 %s25, %s32
      %p284 = scmp.eq.s32.totalorder %s283, 0
      %s286 = sadd.s32 %s285, 1
      %s287 = scalar_select %p284, %s285, %s286
      %p290 = pneg %p284
      %p291 = scmp.eq.s32.totalorder %s25, 1
      %p292 = por %p290, %p291
      %p293 = scmp.ne.s32.totalorder %s285, %s288
      %p294 = scmp.eq.s32.totalorder %s25, 0
      %p295 = por %p293, %p294
      %p296 = scmp.ne.s32.totalorder %s285, %s288
      %p297 = scmp.eq.s32.totalorder %s30, 1
      %p298 = por %p296, %p297
      %p299 = scmp.ne.s32.totalorder %s288, %s289
      %p300 = scmp.eq.s32.totalorder %s30, 0
      %p301 = por %p299, %p300
      %p302 = scmp.ne.s32.totalorder %s288, %s289
      %p303 = scmp.eq.s32.totalorder %s31, 1
      %p304 = por %p302, %p303
      %p306 = scmp.ne.s32.totalorder %s289, %s305
      %p307 = scmp.eq.s32.totalorder %s31, 0
      %p308 = por %p306, %p307
      %s309 = ssub.s32 %s25, %s32
      %p310 = scmp.eq.s32.totalorder %s309, 0
      %s312 = sadd.s32 %s311, 1
      %s313 = scalar_select %p310, %s311, %s312
      %p316 = pneg %p310
      %p317 = scmp.eq.s32.totalorder %s25, 1
      %p318 = por %p316, %p317
      %p319 = scmp.ne.s32.totalorder %s311, %s314
      %p320 = scmp.eq.s32.totalorder %s25, 0
      %p321 = por %p319, %p320
      %p322 = scmp.ne.s32.totalorder %s311, %s314
      %p323 = scmp.eq.s32.totalorder %s30, 1
      %p324 = por %p322, %p323
      %p325 = scmp.ne.s32.totalorder %s314, %s315
      %p326 = scmp.eq.s32.totalorder %s30, 0
      %p327 = por %p325, %p326
      %p328 = scmp.ne.s32.totalorder %s314, %s315
      %p329 = scmp.eq.s32.totalorder %s31, 1
      %p330 = por %p328, %p329
      %p332 = scmp.ne.s32.totalorder %s315, %s331
      %p333 = scmp.eq.s32.totalorder %s31, 0
      %p334 = por %p332, %p333
      %s335 = ssub.s32 %s25, %s32
      %p336 = scmp.eq.s32.totalorder %s335, 0
      %s338 = sadd.s32 %s337, 1
      %s339 = scalar_select %p336, %s337, %s338
      %p342 = pneg %p336
      %p343 = scmp.eq.s32.totalorder %s25, 1
      %p344 = por %p342, %p343
      %p345 = scmp.ne.s32.totalorder %s337, %s340
      %p346 = scmp.eq.s32.totalorder %s25, 0
      %p347 = por %p345, %p346
      %p348 = scmp.ne.s32.totalorder %s337, %s340
      %p349 = scmp.eq.s32.totalorder %s30, 1
      %p350 = por %p348, %p349
      %p351 = scmp.ne.s32.totalorder %s340, %s341
      %p352 = scmp.eq.s32.totalorder %s30, 0
      %p353 = por %p351, %p352
      %p354 = scmp.ne.s32.totalorder %s340, %s341
      %p355 = scmp.eq.s32.totalorder %s31, 1
      %p356 = por %p354, %p355
      %p358 = scmp.ne.s32.totalorder %s341, %s357
      %p359 = scmp.eq.s32.totalorder %s31, 0
      %p360 = por %p358, %p359
      %s361 = ssub.s32 %s25, %s32
      %p362 = scmp.eq.s32.totalorder %s361, 0
      %s364 = sadd.s32 %s363, 1
      %s365 = scalar_select %p362, %s363, %s364
      %p368 = pneg %p362
      %p369 = scmp.eq.s32.totalorder %s25, 1
      %p370 = por %p368, %p369
      %p371 = scmp.ne.s32.totalorder %s363, %s366
      %p372 = scmp.eq.s32.totalorder %s25, 0
      %p373 = por %p371, %p372
      %p374 = scmp.ne.s32.totalorder %s363, %s366
      %p375 = scmp.eq.s32.totalorder %s30, 1
      %p376 = por %p374, %p375
      %p377 = scmp.ne.s32.totalorder %s366, %s367
      %p378 = scmp.eq.s32.totalorder %s30, 0
      %p379 = por %p377, %p378
      %p380 = scmp.ne.s32.totalorder %s366, %s367
      %p381 = scmp.eq.s32.totalorder %s31, 1
      %p382 = por %p380, %p381
      %p384 = scmp.ne.s32.totalorder %s367, %s383
      %p385 = scmp.eq.s32.totalorder %s31, 0
      %p386 = por %p384, %p385
      %s387 = ssub.s32 %s25, %s32
      %p388 = scmp.eq.s32.totalorder %s387, 0
      %s390 = sadd.s32 %s389, 1
      %s391 = scalar_select %p388, %s389, %s390
      %p394 = pneg %p388
      %p395 = scmp.eq.s32.totalorder %s25, 1
      %p396 = por %p394, %p395
      %p397 = scmp.ne.s32.totalorder %s389, %s392
      %p398 = scmp.eq.s32.totalorder %s25, 0
      %p399 = por %p397, %p398
      %p400 = scmp.ne.s32.totalorder %s389, %s392
      %p401 = scmp.eq.s32.totalorder %s30, 1
      %p402 = por %p400, %p401
      %p403 = scmp.ne.s32.totalorder %s392, %s393
      %p404 = scmp.eq.s32.totalorder %s30, 0
      %p405 = por %p403, %p404
      %p406 = scmp.ne.s32.totalorder %s392, %s393
      %p407 = scmp.eq.s32.totalorder %s31, 1
      %p408 = por %p406, %p407
      %p410 = scmp.ne.s32.totalorder %s393, %s409
      %p411 = scmp.eq.s32.totalorder %s31, 0
      %p412 = por %p410, %p411
      %s413 = ssub.s32 %s25, %s32
      %p414 = scmp.eq.s32.totalorder %s413, 0
      %s416 = sadd.s32 %s415, 1
      %s417 = scalar_select %p414, %s415, %s416
      %p420 = pneg %p414
      %p421 = scmp.eq.s32.totalorder %s25, 1
      %p422 = por %p420, %p421
      %p423 = scmp.ne.s32.totalorder %s415, %s418
      %p424 = scmp.eq.s32.totalorder %s25, 0
      %p425 = por %p423, %p424
      %p426 = scmp.ne.s32.totalorder %s415, %s418
      %p427 = scmp.eq.s32.totalorder %s30, 1
      %p428 = por %p426, %p427
      %p429 = scmp.ne.s32.totalorder %s418, %s419
      %p430 = scmp.eq.s32.totalorder %s30, 0
      %p431 = por %p429, %p430
      %p432 = scmp.ne.s32.totalorder %s418, %s419
      %p433 = scmp.eq.s32.totalorder %s31, 1
      %p434 = por %p432, %p433
      %p436 = scmp.ne.s32.totalorder %s419, %s435
      %p437 = scmp.eq.s32.totalorder %s31, 0
      %p438 = por %p436, %p437
      %s439 = ssub.s32 %s25, %s32
      %p440 = scmp.eq.s32.totalorder %s439, 0
      %s442 = sadd.s32 %s441, 1
      %s443 = scalar_select %p440, %s441, %s442
      %p446 = pneg %p440
      %p447 = scmp.eq.s32.totalorder %s25, 1
      %p448 = por %p446, %p447
      %p449 = scmp.ne.s32.totalorder %s441, %s444
      %p450 = scmp.eq.s32.totalorder %s25, 0
      %p451 = por %p449, %p450
      %p452 = scmp.ne.s32.totalorder %s441, %s444
      %p453 = scmp.eq.s32.totalorder %s30, 1
      %p454 = por %p452, %p453
      %p455 = scmp.ne.s32.totalorder %s444, %s445
      %p456 = scmp.eq.s32.totalorder %s30, 0
      %p457 = por %p455, %p456
      %p458 = scmp.ne.s32.totalorder %s444, %s445
      %p459 = scmp.eq.s32.totalorder %s31, 1
      %p460 = por %p458, %p459
      %p462 = scmp.ne.s32.totalorder %s445, %s461
      %p463 = scmp.eq.s32.totalorder %s31, 0
      %p464 = por %p462, %p463
      %s465 = ssub.s32 %s25, %s32
      %p466 = scmp.eq.s32.totalorder %s465, 0
      %s468 = sadd.s32 %s467, 1
      %s469 = scalar_select %p466, %s467, %s468
      %p472 = pneg %p466
      %p473 = scmp.eq.s32.totalorder %s25, 1
      %p474 = por %p472, %p473
      %p475 = scmp.ne.s32.totalorder %s467, %s470
      %p476 = scmp.eq.s32.totalorder %s25, 0
      %p477 = por %p475, %p476
      %p478 = scmp.ne.s32.totalorder %s467, %s470
      %p479 = scmp.eq.s32.totalorder %s30, 1
      %p480 = por %p478, %p479
      %p481 = scmp.ne.s32.totalorder %s470, %s471
      %p482 = scmp.eq.s32.totalorder %s30, 0
      %p483 = por %p481, %p482
      %p484 = scmp.ne.s32.totalorder %s470, %s471
      %p485 = scmp.eq.s32.totalorder %s31, 1
      %p486 = por %p484, %p485
      %p488 = scmp.ne.s32.totalorder %s471, %s487
      %p489 = scmp.eq.s32.totalorder %s31, 0
      %p490 = por %p488, %p489
      %s492 = sadd.s32 %s491, 1
      %p495 = scmp.eq.s32.totalorder %s25, 1
      %p496 = scmp.ne.s32.totalorder %s491, %s493
      %p497 = scmp.eq.s32.totalorder %s25, 0
      %p498 = por %p496, %p497
      %p499 = scmp.ne.s32.totalorder %s491, %s493
      %p500 = scmp.eq.s32.totalorder %s30, 1
      %p501 = por %p499, %p500
      %p502 = scmp.ne.s32.totalorder %s493, %s494
      %p503 = scmp.eq.s32.totalorder %s30, 0
      %p504 = por %p502, %p503
      %p505 = scmp.ne.s32.totalorder %s493, %s494
      %p506 = scmp.eq.s32.totalorder %s31, 1
      %p507 = por %p505, %p506
      %p509 = scmp.ne.s32.totalorder %s494, %s508
      %p510 = scmp.eq.s32.totalorder %s31, 0
      %p511 = por %p509, %p510
      %p512 = scmp.le.s32.totalorder 1, %s25
      %p513 = scmp.lt.s32.totalorder %s25, 3
      %p514 = pnand %p512, %p513
      %p515 = pneg %p514
      // Predicated region
      $region9: #{tpu_custom_call.1} parent=5 // pred_check
        _
      $region10: #{tpu_custom_call.1} parent=5 // pred_check_branch
        %517 = sbr.rel (%p514) target = $region12
      $region11: #{tpu_custom_call.1} parent=5 // pred_region
        %s518 = ssub.s32 %s25, 1
        // Predicated region
        $region13: #{tpu_custom_call.1} parent=11 // pred_check
          %p519 = pneg %p46
        $region14: #{tpu_custom_call.1} parent=11 // pred_check_branch
          %521 = sbr.rel (%p519) target = $region16
        $region15: #{tpu_custom_call.1} parent=11 // pred_region
          _
        $region16: #{tpu_custom_call.1} parent=11 // pred_fallthru
          _
        // Predicated region
        $region17: #{tpu_custom_call.1} parent=11 // pred_check
          %p522 = pneg %p67
        $region18: #{tpu_custom_call.1} parent=11 // pred_check_branch
          %524 = sbr.rel (%p522) target = $region20
        $region19: #{tpu_custom_call.1} parent=11 // pred_region
          _
        $region20: #{tpu_custom_call.1} parent=11 // pred_fallthru
          _
      $region12: #{tpu_custom_call.1} parent=5 // pred_fallthru
        _
      %p525 = scmp.lt.s32.totalorder %s25, 2
      // Predicated region
      $region21: #{tpu_custom_call.1} parent=5 // pred_check
        %p526 = pneg %p525
      $region22: #{tpu_custom_call.1} parent=5 // pred_check_branch
        %528 = sbr.rel (%p526) target = $region24
      $region23: #{tpu_custom_call.1} parent=5 // pred_region
        // Predicated region
        $region25: #{tpu_custom_call.1} parent=23 // pred_check
          %p529 = pneg %p87
        $region26: #{tpu_custom_call.1} parent=23 // pred_check_branch
          %531 = sbr.rel (%p529) target = $region28
        $region27: #{tpu_custom_call.1} parent=23 // pred_region
          %p532 = scmp.lt.s32.totalorder %s25, 1
          %s533 = scalar_select %p532, %s25, 1
          %s534 = smul.addr %s533, 16
          %s535 = smul.addr %s534, 8
          %s536 = scalar_lea.vmem %s2, %s535
        $region28: #{tpu_custom_call.1} parent=23 // pred_fallthru
          _
        // Predicated region
        $region29: #{tpu_custom_call.1} parent=23 // pred_check
          %p537 = pneg %p113
        $region30: #{tpu_custom_call.1} parent=23 // pred_check_branch
          %539 = sbr.rel (%p537) target = $region32
        $region31: #{tpu_custom_call.1} parent=23 // pred_region
          %p540 = scmp.lt.s32.totalorder %s25, 1
          %s541 = scalar_select %p540, %s25, 1
          %s542 = smul.addr %s541, 16
          %s543 = smul.addr %s542, 8
          %s544 = scalar_lea.vmem %s3, %s543
        $region32: #{tpu_custom_call.1} parent=23 // pred_fallthru
          _
        // Predicated region
        $region33: #{tpu_custom_call.1} parent=23 // pred_check
          %p545 = pneg %p139
        $region34: #{tpu_custom_call.1} parent=23 // pred_check_branch
          %547 = sbr.rel (%p545) target = $region36
        $region35: #{tpu_custom_call.1} parent=23 // pred_region
          %p548 = scmp.lt.s32.totalorder %s25, 1
          %s549 = scalar_select %p548, %s25, 1
          %s550 = smul.addr %s549, 16
          %s551 = smul.addr %s550, 8
          %s552 = scalar_lea.vmem %s4, %s551
        $region36: #{tpu_custom_call.1} parent=23 // pred_fallthru
          _
        // Predicated region
        $region37: #{tpu_custom_call.1} parent=23 // pred_check
          %p553 = pneg %p165
        $region38: #{tpu_custom_call.1} parent=23 // pred_check_branch
          %555 = sbr.rel (%p553) target = $region40
        $region39: #{tpu_custom_call.1} parent=23 // pred_region
          %p556 = scmp.lt.s32.totalorder %s25, 1
          %s557 = scalar_select %p556, %s25, 1
          %s558 = smul.addr %s557, 4
          %s559 = scalar_lea.vmem %s5, %s558
        $region40: #{tpu_custom_call.1} parent=23 // pred_fallthru
          _
        // Predicated region
        $region41: #{tpu_custom_call.1} parent=23 // pred_check
          %p560 = pneg %p191
        $region42: #{tpu_custom_call.1} parent=23 // pred_check_branch
          %562 = sbr.rel (%p560) target = $region44
        $region43: #{tpu_custom_call.1} parent=23 // pred_region
          %p563 = scmp.lt.s32.totalorder %s25, 1
          %s564 = scalar_select %p563, %s25, 1
          %s565 = smul.addr %s564, 4
          %s566 = scalar_lea.vmem %s6, %s565
        $region44: #{tpu_custom_call.1} parent=23 // pred_fallthru
          _
        // Predicated region
        $region45: #{tpu_custom_call.1} parent=23 // pred_check
          %p567 = pneg %p217
        $region46: #{tpu_custom_call.1} parent=23 // pred_check_branch
          %569 = sbr.rel (%p567) target = $region48
        $region47: #{tpu_custom_call.1} parent=23 // pred_region
          %p570 = scmp.lt.s32.totalorder %s25, 1
          %s571 = scalar_select %p570, %s25, 1
          %s572 = smul.addr %s571, 4
          %s573 = scalar_lea.vmem %s7, %s572
        $region48: #{tpu_custom_call.1} parent=23 // pred_fallthru
          _
        // Predicated region
        $region49: #{tpu_custom_call.1} parent=23 // pred_check
          %p574 = pneg %p243
        $region50: #{tpu_custom_call.1} parent=23 // pred_check_branch
          %576 = sbr.rel (%p574) target = $region52
        $region51: #{tpu_custom_call.1} parent=23 // pred_region
          %p577 = scmp.lt.s32.totalorder %s25, 1
          %s578 = scalar_select %p577, %s25, 1
          %s579 = smul.addr %s578, 4
          %s580 = smul.addr %s579, 8
          %s581 = scalar_lea.vmem %s8, %s580
        $region52: #{tpu_custom_call.1} parent=23 // pred_fallthru
          _
        // Predicated region
        $region53: #{tpu_custom_call.1} parent=23 // pred_check
          %p582 = pneg %p269
        $region54: #{tpu_custom_call.1} parent=23 // pred_check_branch
          %584 = sbr.rel (%p582) target = $region56
        $region55: #{tpu_custom_call.1} parent=23 // pred_region
          %p585 = scmp.lt.s32.totalorder %s25, 1
          %s586 = scalar_select %p585, %s25, 1
          %s587 = scalar_lea.vmem %s9, %s586
        $region56: #{tpu_custom_call.1} parent=23 // pred_fallthru
          _
        // Predicated region
        $region57: #{tpu_custom_call.1} parent=23 // pred_check
          %p588 = pneg %p295
        $region58: #{tpu_custom_call.1} parent=23 // pred_check_branch
          %590 = sbr.rel (%p588) target = $region60
        $region59: #{tpu_custom_call.1} parent=23 // pred_region
          %p591 = scmp.lt.s32.totalorder %s25, 1
          %s592 = scalar_select %p591, %s25, 1
          %s593 = scalar_lea.vmem %s10, %s592
        $region60: #{tpu_custom_call.1} parent=23 // pred_fallthru
          _
        // Predicated region
        $region61: #{tpu_custom_call.1} parent=23 // pred_check
          %p594 = pneg %p321
        $region62: #{tpu_custom_call.1} parent=23 // pred_check_branch
          %596 = sbr.rel (%p594) target = $region64
        $region63: #{tpu_custom_call.1} parent=23 // pred_region
          %p597 = scmp.lt.s32.totalorder %s25, 1
          %s598 = scalar_select %p597, %s25, 1
          %s599 = scalar_lea.vmem %s11, %s598
        $region64: #{tpu_custom_call.1} parent=23 // pred_fallthru
          _
        // Predicated region
        $region65: #{tpu_custom_call.1} parent=23 // pred_check
          %p600 = pneg %p347
        $region66: #{tpu_custom_call.1} parent=23 // pred_check_branch
          %602 = sbr.rel (%p600) target = $region68
        $region67: #{tpu_custom_call.1} parent=23 // pred_region
          %p603 = scmp.lt.s32.totalorder %s25, 1
          %s604 = scalar_select %p603, %s25, 1
          %s605 = scalar_lea.vmem %s12, %s604
        $region68: #{tpu_custom_call.1} parent=23 // pred_fallthru
          _
        // Predicated region
        $region69: #{tpu_custom_call.1} parent=23 // pred_check
          %p606 = pneg %p373
        $region70: #{tpu_custom_call.1} parent=23 // pred_check_branch
          %608 = sbr.rel (%p606) target = $region72
        $region71: #{tpu_custom_call.1} parent=23 // pred_region
          %p609 = scmp.lt.s32.totalorder %s25, 1
          %s610 = scalar_select %p609, %s25, 1
          %s611 = scalar_lea.vmem %s13, %s610
        $region72: #{tpu_custom_call.1} parent=23 // pred_fallthru
          _
        // Predicated region
        $region73: #{tpu_custom_call.1} parent=23 // pred_check
          %p612 = pneg %p399
        $region74: #{tpu_custom_call.1} parent=23 // pred_check_branch
          %614 = sbr.rel (%p612) target = $region76
        $region75: #{tpu_custom_call.1} parent=23 // pred_region
          %p615 = scmp.lt.s32.totalorder %s25, 1
          %s616 = scalar_select %p615, %s25, 1
          %s617 = smul.addr %s616, 4
          %s618 = smul.addr %s617, 8
          %s619 = scalar_lea.vmem %s14, %s618
        $region76: #{tpu_custom_call.1} parent=23 // pred_fallthru
          _
        // Predicated region
        $region77: #{tpu_custom_call.1} parent=23 // pred_check
          %p620 = pneg %p425
        $region78: #{tpu_custom_call.1} parent=23 // pred_check_branch
          %622 = sbr.rel (%p620) target = $region80
        $region79: #{tpu_custom_call.1} parent=23 // pred_region
          %p623 = scmp.lt.s32.totalorder %s25, 1
          %s624 = scalar_select %p623, %s25, 1
          %s625 = scalar_lea.vmem %s15, %s624
        $region80: #{tpu_custom_call.1} parent=23 // pred_fallthru
          _
        // Predicated region
        $region81: #{tpu_custom_call.1} parent=23 // pred_check
          %p626 = pneg %p451
        $region82: #{tpu_custom_call.1} parent=23 // pred_check_branch
          %628 = sbr.rel (%p626) target = $region84
        $region83: #{tpu_custom_call.1} parent=23 // pred_region
          %p629 = scmp.lt.s32.totalorder %s25, 1
          %s630 = scalar_select %p629, %s25, 1
          %s631 = smul.addr %s630, 16
          %s632 = smul.addr %s631, 8
          %s633 = scalar_lea.vmem %s16, %s632
        $region84: #{tpu_custom_call.1} parent=23 // pred_fallthru
          _
        // Predicated region
        $region85: #{tpu_custom_call.1} parent=23 // pred_check
          %p634 = pneg %p477
        $region86: #{tpu_custom_call.1} parent=23 // pred_check_branch
          %636 = sbr.rel (%p634) target = $region88
        $region87: #{tpu_custom_call.1} parent=23 // pred_region
          %p637 = scmp.lt.s32.totalorder %s25, 1
          %s638 = scalar_select %p637, %s25, 1
          %s639 = scalar_lea.vmem %s17, %s638
        $region88: #{tpu_custom_call.1} parent=23 // pred_fallthru
          _
      $region24: #{tpu_custom_call.1} parent=5 // pred_fallthru
        _
      %p640 = scmp.le.s32.totalorder 1, %s25
      %p641 = scmp.lt.s32.totalorder %s25, 3
      %p642 = pnand %p640, %p641
      %p643 = pneg %p642
      // Predicated region
      $region89: #{tpu_custom_call.1} parent=5 // pred_check
        _
      $region90: #{tpu_custom_call.1} parent=5 // pred_check_branch
        %645 = sbr.rel (%p642) target = $region92
      $region91: #{tpu_custom_call.1} parent=5 // pred_region
        %s646 = ssub.s32 %s25, 1
        %p647 = pneg %p46
        %p648 = pneg %p43
        %p649 = pneg %p67
        %p650 = pneg %p64
        %p651 = scmp.lt.s32.totalorder %s30, 1
        %s652 = scalar_select %p651, %s30, 1
        %s653 = smul.addr %s652, 16
        %s654 = smul.addr %s653, 8
        %s655 = scalar_lea.vmem %s2, %s654
        %p656 = pneg %p93
        %p657 = pneg %p90
        %p658 = scmp.lt.s32.totalorder %s30, 1
        %s659 = scalar_select %p658, %s30, 1
        %s660 = smul.addr %s659, 16
        %s661 = smul.addr %s660, 8
        %s662 = scalar_lea.vmem %s3, %s661
        %p663 = pneg %p119
        %p664 = pneg %p116
        %p665 = scmp.lt.s32.totalorder %s30, 1
        %s666 = scalar_select %p665, %s30, 1
        %s667 = smul.addr %s666, 16
        %s668 = smul.addr %s667, 8
        %s669 = scalar_lea.vmem %s4, %s668
        %p670 = pneg %p145
        %p671 = pneg %p142
        %p672 = scmp.lt.s32.totalorder %s30, 1
        %s673 = scalar_select %p672, %s30, 1
        %s674 = smul.addr %s673, 4
        %s675 = scalar_lea.vmem %s5, %s674
        %p676 = pneg %p171
        %p677 = pneg %p168
        %p678 = scmp.lt.s32.totalorder %s30, 1
        %s679 = scalar_select %p678, %s30, 1
        %s680 = smul.addr %s679, 4
        %s681 = scalar_lea.vmem %s6, %s680
        %p682 = pneg %p197
        %p683 = pneg %p194
        %p684 = scmp.lt.s32.totalorder %s30, 1
        %s685 = scalar_select %p684, %s30, 1
        %s686 = smul.addr %s685, 4
        %s687 = scalar_lea.vmem %s7, %s686
        %p688 = pneg %p223
        %p689 = pneg %p220
        %p690 = scmp.lt.s32.totalorder %s30, 1
        %s691 = scalar_select %p690, %s30, 1
        %s692 = smul.addr %s691, 4
        %s693 = smul.addr %s692, 8
        %s694 = scalar_lea.vmem %s8, %s693
        %p695 = pneg %p249
        %p696 = pneg %p246
        %p697 = scmp.lt.s32.totalorder %s30, 1
        %s698 = scalar_select %p697, %s30, 1
        %s699 = scalar_lea.vmem %s9, %s698
        %p700 = pneg %p275
        %p701 = pneg %p272
        %p702 = scmp.lt.s32.totalorder %s30, 1
        %s703 = scalar_select %p702, %s30, 1
        %s704 = scalar_lea.vmem %s10, %s703
        %p705 = pneg %p301
        %p706 = pneg %p298
        %p707 = scmp.lt.s32.totalorder %s30, 1
        %s708 = scalar_select %p707, %s30, 1
        %s709 = scalar_lea.vmem %s11, %s708
        %p710 = pneg %p327
        %p711 = pneg %p324
        %p712 = scmp.lt.s32.totalorder %s30, 1
        %s713 = scalar_select %p712, %s30, 1
        %s714 = scalar_lea.vmem %s12, %s713
        %p715 = pneg %p353
        %p716 = pneg %p350
        %p717 = scmp.lt.s32.totalorder %s30, 1
        %s718 = scalar_select %p717, %s30, 1
        %s719 = scalar_lea.vmem %s13, %s718
        %p720 = pneg %p379
        %p721 = pneg %p376
        %p722 = scmp.lt.s32.totalorder %s30, 1
        %s723 = scalar_select %p722, %s30, 1
        %s724 = smul.addr %s723, 4
        %s725 = smul.addr %s724, 8
        %s726 = scalar_lea.vmem %s14, %s725
        %p727 = pneg %p405
        %p728 = pneg %p402
        %p729 = scmp.lt.s32.totalorder %s30, 1
        %s730 = scalar_select %p729, %s30, 1
        %s731 = scalar_lea.vmem %s15, %s730
        %p732 = pneg %p431
        %p733 = pneg %p428
        %p734 = scmp.lt.s32.totalorder %s30, 1
        %s735 = scalar_select %p734, %s30, 1
        %s736 = smul.addr %s735, 16
        %s737 = smul.addr %s736, 8
        %s738 = scalar_lea.vmem %s16, %s737
        %p739 = pneg %p457
        %p740 = pneg %p454
        %p741 = scmp.lt.s32.totalorder %s30, 1
        %s742 = scalar_select %p741, %s30, 1
        %s743 = scalar_lea.vmem %s17, %s742
        %p744 = pneg %p483
        %p745 = pneg %p480
        %p746 = pneg %p504
        %p747 = pneg %p501
        %p748 = scmp.lt.s32.totalorder %s30, 1
        %s749 = scalar_select %p748, %s30, 1
        %s750 = smul.addr %s749, 16
        %s751 = smul.addr %s750, 8
        %s752 = scalar_lea.vmem %s2, %s751
        %p753 = scmp.lt.s32.totalorder %s30, 1
        %s754 = scalar_select %p753, %s30, 1
        %s755 = smul.addr %s754, 16
        %s756 = smul.addr %s755, 8
        %s757 = scalar_lea.vmem %s3, %s756
        %p758 = scmp.lt.s32.totalorder %s30, 1
        %s759 = scalar_select %p758, %s30, 1
        %s760 = smul.addr %s759, 16
        %s761 = smul.addr %s760, 8
        %s762 = scalar_lea.vmem %s4, %s761
        %p763 = scmp.lt.s32.totalorder %s30, 1
        %s764 = scalar_select %p763, %s30, 1
        %s765 = smul.addr %s764, 4
        %s766 = scalar_lea.vmem %s5, %s765
        %p767 = scmp.lt.s32.totalorder %s30, 1
        %s768 = scalar_select %p767, %s30, 1
        %s769 = smul.addr %s768, 4
        %s770 = scalar_lea.vmem %s6, %s769
        %p771 = scmp.lt.s32.totalorder %s30, 1
        %s772 = scalar_select %p771, %s30, 1
        %s773 = smul.addr %s772, 4
        %s774 = scalar_lea.vmem %s7, %s773
        %p775 = scmp.lt.s32.totalorder %s30, 1
        %s776 = scalar_select %p775, %s30, 1
        %s777 = smul.addr %s776, 4
        %s778 = smul.addr %s777, 8
        %s779 = scalar_lea.vmem %s8, %s778
        %p780 = scmp.lt.s32.totalorder %s30, 1
        %s781 = scalar_select %p780, %s30, 1
        %s782 = scalar_lea.vmem %s9, %s781
        %p783 = scmp.lt.s32.totalorder %s30, 1
        %s784 = scalar_select %p783, %s30, 1
        %s785 = scalar_lea.vmem %s10, %s784
        %p786 = scmp.lt.s32.totalorder %s30, 1
        %s787 = scalar_select %p786, %s30, 1
        %s788 = scalar_lea.vmem %s11, %s787
        %p789 = scmp.lt.s32.totalorder %s30, 1
        %s790 = scalar_select %p789, %s30, 1
        %s791 = scalar_lea.vmem %s12, %s790
        %p792 = scmp.lt.s32.totalorder %s30, 1
        %s793 = scalar_select %p792, %s30, 1
        %s794 = scalar_lea.vmem %s13, %s793
        %p795 = scmp.lt.s32.totalorder %s30, 1
        %s796 = scalar_select %p795, %s30, 1
        %s797 = smul.addr %s796, 4
        %s798 = smul.addr %s797, 8
        %s799 = scalar_lea.vmem %s14, %s798
        %p800 = scmp.lt.s32.totalorder %s30, 1
        %s801 = scalar_select %p800, %s30, 1
        %s802 = scalar_lea.vmem %s15, %s801
        %p803 = scmp.lt.s32.totalorder %s30, 1
        %s804 = scalar_select %p803, %s30, 1
        %s805 = smul.addr %s804, 16
        %s806 = smul.addr %s805, 8
        %s807 = scalar_lea.vmem %s16, %s806
        %p808 = scmp.lt.s32.totalorder %s30, 1
        %s809 = scalar_select %p808, %s30, 1
        %s810 = scalar_lea.vmem %s17, %s809
        %p811 = scmp.eq.s32.totalorder %s30, 0
        // Predicated region
        $region93: #{tpu_custom_call.1} parent=91 // pred_check
          %p812 = pneg %p811
        $region94: #{tpu_custom_call.1} parent=91 // pred_check_branch
          %814 = sbr.rel (%p812) target = $region96
        $region95: #{tpu_custom_call.1} parent=91 // pred_region
          %v815 = vld [vmem:[%s0] sm:$0xff]
          %v816 = vld [vmem:[%s0 + $0x8] sm:$0xff]
          %vm817 = vcmask 261120
          %818 = vst.msk [vmem:[#allocation2] sm:$0xff] %vm817, %v815
          %819 = vst.msk [vmem:[#allocation2 + $0x8] sm:$0xff] %vm817, %v816
        $region96: #{tpu_custom_call.1} parent=91 // pred_fallthru
          _
        %v820 = vld [vmem:[#allocation2] sm:$0xff]
        %v821 = vld [vmem:[#allocation2 + $0x8] sm:$0xff]
        %v822 = vld [vmem:[%s1] sm:$0x1]
        %v823 = vld [vmem:[%s1 + $0x1] sm:$0x1]
        %v824 = vld [vmem:[%s752] sm:$0xff]
        %v825 = vld [vmem:[%s752 + $0x8] sm:$0xff]
        %v826 = vld [vmem:[%s752 + $0x10] sm:$0xff]
        %v827 = vld [vmem:[%s752 + $0x18] sm:$0xff]
        %v828 = vld [vmem:[%s766] sm:$0x1]
        %v830 = vperm.slane %v828, 0
        %vm832 = vcmask 261120
        %v834 = vsel %vm832, %v820, 0
        %v837 = vsel %vm832, %v821, 0
        %839 = vmatpush.msra.mxu0 0.0
        %840 = vmatpush.msra.mxu0 0.0
        %841 = vmatpush.msra.mxu0 0.0
        %842 = vmatpush.msra.mxu0 0.0
        %843 = vmatpush.msra.mxu0 0.0
        %844 = vmatpush.msra.mxu0 0.0
        %845 = vmatpush.msra.mxu0 0.0
        %846 = vmatpush.msra.mxu0 0.0
        %847 = vmatpush.msra.mxu0 0.0
        %848 = vmatpush.msra.mxu0 0.0
        %849 = vmatpush.msra.mxu0 0.0
        %850 = vmatpush.msra.mxu0 0.0
        %851 = vmatpush.msra.mxu0 %v827
        %852 = vmatpush.msra.mxu0 %v826
        %853 = vmatpush.msra.mxu0 %v825
        %854 = vmatpush.msra.mxu0 %v824
        %855 = vmatmul.f32.gmra.mxu0 %v834
        %v856 = vpop.f32.mrf.mxu0
        %v857 = vadd.f32 %v830, %v856
        %858 = vmatmul.f32.gmra.mxu0 %v837
        %v859 = vpop.f32.mrf.mxu0
        %v860 = vadd.f32 %v830, %v859
        %861 = vdwg.mxu0
        %v862 = vld [vmem:[%s757] sm:$0xff]
        %v863 = vld [vmem:[%s757 + $0x8] sm:$0xff]
        %v864 = vld [vmem:[%s757 + $0x10] sm:$0xff]
        %v865 = vld [vmem:[%s757 + $0x18] sm:$0xff]
        %v866 = vld [vmem:[%s770] sm:$0x1]
        %v868 = vperm.slane %v866, 0
        %870 = vmatpush.msra.mxu0 0.0
        %871 = vmatpush.msra.mxu0 0.0
        %872 = vmatpush.msra.mxu0 0.0
        %873 = vmatpush.msra.mxu0 0.0
        %874 = vmatpush.msra.mxu0 0.0
        %875 = vmatpush.msra.mxu0 0.0
        %876 = vmatpush.msra.mxu0 0.0
        %877 = vmatpush.msra.mxu0 0.0
        %878 = vmatpush.msra.mxu0 0.0
        %879 = vmatpush.msra.mxu0 0.0
        %880 = vmatpush.msra.mxu0 0.0
        %881 = vmatpush.msra.mxu0 0.0
        %882 = vmatpush.msra.mxu0 %v865
        %883 = vmatpush.msra.mxu0 %v864
        %884 = vmatpush.msra.mxu0 %v863
        %885 = vmatpush.msra.mxu0 %v862
        %886 = vmatmul.f32.gmra.mxu0 %v834
        %v887 = vpop.f32.mrf.mxu0
        %v888 = vadd.f32 %v868, %v887
        %889 = vmatmul.f32.gmra.mxu0 %v837
        %v890 = vpop.f32.mrf.mxu0
        %v891 = vadd.f32 %v868, %v890
        %892 = vdwg.mxu0
        %v893 = vld [vmem:[%s762] sm:$0xff]
        %v894 = vld [vmem:[%s762 + $0x8] sm:$0xff]
        %v895 = vld [vmem:[%s762 + $0x10] sm:$0xff]
        %v896 = vld [vmem:[%s762 + $0x18] sm:$0xff]
        %v897 = vld [vmem:[%s774] sm:$0x1]
        %v899 = vperm.slane %v897, 0
        %901 = vmatpush.msra.mxu0 0.0
        %902 = vmatpush.msra.mxu0 0.0
        %903 = vmatpush.msra.mxu0 0.0
        %904 = vmatpush.msra.mxu0 0.0
        %905 = vmatpush.msra.mxu0 0.0
        %906 = vmatpush.msra.mxu0 0.0
        %907 = vmatpush.msra.mxu0 0.0
        %908 = vmatpush.msra.mxu0 0.0
        %909 = vmatpush.msra.mxu0 0.0
        %910 = vmatpush.msra.mxu0 0.0
        %911 = vmatpush.msra.mxu0 0.0
        %912 = vmatpush.msra.mxu0 0.0
        %913 = vmatpush.msra.mxu0 %v896
        %914 = vmatpush.msra.mxu0 %v895
        %915 = vmatpush.msra.mxu0 %v894
        %916 = vmatpush.msra.mxu0 %v893
        %917 = vmatmul.f32.gmra.mxu0 %v834
        %v918 = vpop.f32.mrf.mxu0
        %v919 = vadd.f32 %v899, %v918
        %920 = vmatmul.f32.gmra.mxu0 %v837
        %v921 = vpop.f32.mrf.mxu0
        %v922 = vadd.f32 %v899, %v921
        %923 = vdwg.mxu0
        %vm924 = vcmask 64512
        %v926 = vsel %vm924, %v857, 0
        %v929 = vsel %vm924, %v888, 0
        %931 = vmatpush.xpose.msra.mxu0 0.0
        %932 = vmatpush.xpose.msra.mxu0 0.0
        %933 = vmatpush.xpose.msra.mxu0 0.0
        %934 = vmatpush.xpose.msra.mxu0 0.0
        %935 = vmatpush.xpose.msra.mxu0 0.0
        %936 = vmatpush.xpose.msra.mxu0 0.0
        %937 = vmatpush.xpose.msra.mxu0 0.0
        %938 = vmatpush.xpose.msra.mxu0 0.0
        %939 = vmatpush.xpose.msra.mxu0 0.0
        %940 = vmatpush.xpose.msra.mxu0 0.0
        %941 = vmatpush.xpose.msra.mxu0 0.0
        %942 = vmatpush.xpose.msra.mxu0 0.0
        %943 = vmatpush.xpose.msra.mxu0 0.0
        %944 = vmatpush.xpose.msra.mxu0 0.0
        %945 = vmatpush.xpose.msra.mxu0 0.0
        %946 = vmatpush.xpose.msra.mxu0 %v929
        %947 = vmatmul.f32.gmra.mxu0 %v926
        %v948 = vpop.f32.mrf.mxu0
        %v949 = vadd.f32 0.0, %v948
        %950 = vdwg.mxu0
        %v952 = vsel %vm924, %v860, 0
        %v955 = vsel %vm924, %v891, 0
        %957 = vmatpush.xpose.msra.mxu0 0.0
        %958 = vmatpush.xpose.msra.mxu0 0.0
        %959 = vmatpush.xpose.msra.mxu0 0.0
        %960 = vmatpush.xpose.msra.mxu0 0.0
        %961 = vmatpush.xpose.msra.mxu0 0.0
        %962 = vmatpush.xpose.msra.mxu0 0.0
        %963 = vmatpush.xpose.msra.mxu0 0.0
        %964 = vmatpush.xpose.msra.mxu0 0.0
        %965 = vmatpush.xpose.msra.mxu0 0.0
        %966 = vmatpush.xpose.msra.mxu0 0.0
        %967 = vmatpush.xpose.msra.mxu0 0.0
        %968 = vmatpush.xpose.msra.mxu0 0.0
        %969 = vmatpush.xpose.msra.mxu0 0.0
        %970 = vmatpush.xpose.msra.mxu0 0.0
        %971 = vmatpush.xpose.msra.mxu0 0.0
        %972 = vmatpush.xpose.msra.mxu0 %v955
        %973 = vmatmul.f32.gmra.mxu0 %v952
        %v974 = vpop.f32.mrf.mxu0
        %v975 = vadd.f32 0.0, %v974
        %976 = vdwg.mxu0
        %v977 = vmul.f32 %v949, 0.35355338
        %v978 = vmul.f32 %v975, 0.35355338
        %v981 = vperm.slane %v822, 0
        %v982 = vperm.slane %v823, 0
        %v985 = vadd.f32 %v977, %v981
        %v986 = vadd.f32 %v978, %v982
        %v987 = vsel %vm924, %v985, -inf
        %988 = vmax.xlane.f32.xlu0 %v987
        %v989 = vpop.xlane.xlu0 %988
        %v990 = vsel %vm924, %v986, -inf
        %991 = vmax.xlane.f32.xlu0 %v990
        %v992 = vpop.xlane.xlu0 %991
        %v993 = vsub.f32 %v985, %v989
        %v994 = vsub.f32 %v986, %v992
        %v995 = vmul.f32 %v993, 1.442695
        %v996 = vpow.pop %v995
        %v997 = vmul.f32 %v994, 1.442695
        %v998 = vpow.pop %v997
        %v999 = vsel %vm924, %v996, 0.0
        %1000 = vadd.xlane.f32.xlu0 %v999
        %v1001 = vpop.xlane.xlu0 %1000
        %v1002 = vsel %vm924, %v998, 0.0
        %1003 = vadd.xlane.f32.xlu0 %v1002
        %v1004 = vpop.xlane.xlu0 %1003
        %v1005 = vrcp.pop %v1001
        %v1006 = vrcp.pop %v1004
        %v1007 = vmul.f32 %v996, %v1005
        %v1008 = vmul.f32 %v998, %v1006
        %v1010 = vsel %vm924, %v1007, 0
        %1012 = vmatpush.msra.mxu0 0.0
        %1013 = vmatpush.msra.mxu0 0.0
        %1014 = vmatpush.msra.mxu0 0.0
        %1015 = vmatpush.msra.mxu0 0.0
        %1016 = vmatpush.msra.mxu0 0.0
        %1017 = vmatpush.msra.mxu0 0.0
        %1018 = vmatpush.msra.mxu0 0.0
        %1019 = vmatpush.msra.mxu0 0.0
        %1020 = vmatpush.msra.mxu0 0.0
        %1021 = vmatpush.msra.mxu0 0.0
        %1022 = vmatpush.msra.mxu0 0.0
        %1023 = vmatpush.msra.mxu0 0.0
        %1024 = vmatpush.msra.mxu0 0.0
        %1025 = vmatpush.msra.mxu0 0.0
        %1026 = vmatpush.msra.mxu0 0.0
        %1027 = vmatpush.msra.mxu0 %v919
        %1028 = vmatmul.f32.gmra.mxu0 %v1010
        %v1029 = vpop.f32.mrf.mxu0
        %v1030 = vadd.f32 0.0, %v1029
        %1031 = vdwg.mxu0
        %v1033 = vsel %vm924, %v1008, 0
        %1035 = vmatpush.msra.mxu0 0.0
        %1036 = vmatpush.msra.mxu0 0.0
        %1037 = vmatpush.msra.mxu0 0.0
        %1038 = vmatpush.msra.mxu0 0.0
        %1039 = vmatpush.msra.mxu0 0.0
        %1040 = vmatpush.msra.mxu0 0.0
        %1041 = vmatpush.msra.mxu0 0.0
        %1042 = vmatpush.msra.mxu0 0.0
        %1043 = vmatpush.msra.mxu0 0.0
        %1044 = vmatpush.msra.mxu0 0.0
        %1045 = vmatpush.msra.mxu0 0.0
        %1046 = vmatpush.msra.mxu0 0.0
        %1047 = vmatpush.msra.mxu0 0.0
        %1048 = vmatpush.msra.mxu0 0.0
        %1049 = vmatpush.msra.mxu0 0.0
        %1050 = vmatpush.msra.mxu0 %v922
        %1051 = vmatmul.f32.gmra.mxu0 %v1033
        %v1052 = vpop.f32.mrf.mxu0
        %v1053 = vadd.f32 0.0, %v1052
        %1054 = vdwg.mxu0
        %v1055 = vld [vmem:[%s779] sm:$0xff]
        %s1056 = scalar_lea.vmem %s752, 32
        %v1057 = vld [vmem:[%s1056] sm:$0xff]
        %v1058 = vld [vmem:[%s1056 + $0x8] sm:$0xff]
        %v1059 = vld [vmem:[%s1056 + $0x10] sm:$0xff]
        %v1060 = vld [vmem:[%s1056 + $0x18] sm:$0xff]
        %s1061 = scalar_lea.vmem %s766, 1
        %v1062 = vld [vmem:[%s1061] sm:$0x1]
        %v1064 = vperm.slane %v1062, 0
        %1066 = vmatpush.msra.mxu0 0.0
        %1067 = vmatpush.msra.mxu0 0.0
        %1068 = vmatpush.msra.mxu0 0.0
        %1069 = vmatpush.msra.mxu0 0.0
        %1070 = vmatpush.msra.mxu0 0.0
        %1071 = vmatpush.msra.mxu0 0.0
        %1072 = vmatpush.msra.mxu0 0.0
        %1073 = vmatpush.msra.mxu0 0.0
        %1074 = vmatpush.msra.mxu0 0.0
        %1075 = vmatpush.msra.mxu0 0.0
        %1076 = vmatpush.msra.mxu0 0.0
        %1077 = vmatpush.msra.mxu0 0.0
        %1078 = vmatpush.msra.mxu0 %v1060
        %1079 = vmatpush.msra.mxu0 %v1059
        %1080 = vmatpush.msra.mxu0 %v1058
        %1081 = vmatpush.msra.mxu0 %v1057
        %1082 = vmatmul.f32.gmra.mxu0 %v834
        %v1083 = vpop.f32.mrf.mxu0
        %v1084 = vadd.f32 %v1064, %v1083
        %1085 = vmatmul.f32.gmra.mxu0 %v837
        %v1086 = vpop.f32.mrf.mxu0
        %v1087 = vadd.f32 %v1064, %v1086
        %1088 = vdwg.mxu0
        %s1089 = scalar_lea.vmem %s757, 32
        %v1090 = vld [vmem:[%s1089] sm:$0xff]
        %v1091 = vld [vmem:[%s1089 + $0x8] sm:$0xff]
        %v1092 = vld [vmem:[%s1089 + $0x10] sm:$0xff]
        %v1093 = vld [vmem:[%s1089 + $0x18] sm:$0xff]
        %s1094 = scalar_lea.vmem %s770, 1
        %v1095 = vld [vmem:[%s1094] sm:$0x1]
        %v1097 = vperm.slane %v1095, 0
        %1099 = vmatpush.msra.mxu0 0.0
        %1100 = vmatpush.msra.mxu0 0.0
        %1101 = vmatpush.msra.mxu0 0.0
        %1102 = vmatpush.msra.mxu0 0.0
        %1103 = vmatpush.msra.mxu0 0.0
        %1104 = vmatpush.msra.mxu0 0.0
        %1105 = vmatpush.msra.mxu0 0.0
        %1106 = vmatpush.msra.mxu0 0.0
        %1107 = vmatpush.msra.mxu0 0.0
        %1108 = vmatpush.msra.mxu0 0.0
        %1109 = vmatpush.msra.mxu0 0.0
        %1110 = vmatpush.msra.mxu0 0.0
        %1111 = vmatpush.msra.mxu0 %v1093
        %1112 = vmatpush.msra.mxu0 %v1092
        %1113 = vmatpush.msra.mxu0 %v1091
        %1114 = vmatpush.msra.mxu0 %v1090
        %1115 = vmatmul.f32.gmra.mxu0 %v834
        %v1116 = vpop.f32.mrf.mxu0
        %v1117 = vadd.f32 %v1097, %v1116
        %1118 = vmatmul.f32.gmra.mxu0 %v837
        %v1119 = vpop.f32.mrf.mxu0
        %v1120 = vadd.f32 %v1097, %v1119
        %1121 = vdwg.mxu0
        %s1122 = scalar_lea.vmem %s762, 32
        %v1123 = vld [vmem:[%s1122] sm:$0xff]
        %v1124 = vld [vmem:[%s1122 + $0x8] sm:$0xff]
        %v1125 = vld [vmem:[%s1122 + $0x10] sm:$0xff]
        %v1126 = vld [vmem:[%s1122 + $0x18] sm:$0xff]
        %s1127 = scalar_lea.vmem %s774, 1
        %v1128 = vld [vmem:[%s1127] sm:$0x1]
        %v1130 = vperm.slane %v1128, 0
        %1132 = vmatpush.msra.mxu0 0.0
        %1133 = vmatpush.msra.mxu0 0.0
        %1134 = vmatpush.msra.mxu0 0.0
        %1135 = vmatpush.msra.mxu0 0.0
        %1136 = vmatpush.msra.mxu0 0.0
        %1137 = vmatpush.msra.mxu0 0.0
        %1138 = vmatpush.msra.mxu0 0.0
        %1139 = vmatpush.msra.mxu0 0.0
        %1140 = vmatpush.msra.mxu0 0.0
        %1141 = vmatpush.msra.mxu0 0.0
        %1142 = vmatpush.msra.mxu0 0.0
        %1143 = vmatpush.msra.mxu0 0.0
        %1144 = vmatpush.msra.mxu0 %v1126
        %1145 = vmatpush.msra.mxu0 %v1125
        %1146 = vmatpush.msra.mxu0 %v1124
        %1147 = vmatpush.msra.mxu0 %v1123
        %1148 = vmatmul.f32.gmra.mxu0 %v834
        %v1149 = vpop.f32.mrf.mxu0
        %v1150 = vadd.f32 %v1130, %v1149
        %1151 = vmatmul.f32.gmra.mxu0 %v837
        %v1152 = vpop.f32.mrf.mxu0
        %v1153 = vadd.f32 %v1130, %v1152
        %1154 = vdwg.mxu0
        %v1156 = vsel %vm924, %v1084, 0
        %v1159 = vsel %vm924, %v1117, 0
        %1161 = vmatpush.xpose.msra.mxu0 0.0
        %1162 = vmatpush.xpose.msra.mxu0 0.0
        %1163 = vmatpush.xpose.msra.mxu0 0.0
        %1164 = vmatpush.xpose.msra.mxu0 0.0
        %1165 = vmatpush.xpose.msra.mxu0 0.0
        %1166 = vmatpush.xpose.msra.mxu0 0.0
        %1167 = vmatpush.xpose.msra.mxu0 0.0
        %1168 = vmatpush.xpose.msra.mxu0 0.0
        %1169 = vmatpush.xpose.msra.mxu0 0.0
        %1170 = vmatpush.xpose.msra.mxu0 0.0
        %1171 = vmatpush.xpose.msra.mxu0 0.0
        %1172 = vmatpush.xpose.msra.mxu0 0.0
        %1173 = vmatpush.xpose.msra.mxu0 0.0
        %1174 = vmatpush.xpose.msra.mxu0 0.0
        %1175 = vmatpush.xpose.msra.mxu0 0.0
        %1176 = vmatpush.xpose.msra.mxu0 %v1159
        %1177 = vmatmul.f32.gmra.mxu0 %v1156
        %v1178 = vpop.f32.mrf.mxu0
        %v1179 = vadd.f32 0.0, %v1178
        %1180 = vdwg.mxu0
        %v1182 = vsel %vm924, %v1087, 0
        %v1185 = vsel %vm924, %v1120, 0
        %1187 = vmatpush.xpose.msra.mxu0 0.0
        %1188 = vmatpush.xpose.msra.mxu0 0.0
        %1189 = vmatpush.xpose.msra.mxu0 0.0
        %1190 = vmatpush.xpose.msra.mxu0 0.0
        %1191 = vmatpush.xpose.msra.mxu0 0.0
        %1192 = vmatpush.xpose.msra.mxu0 0.0
        %1193 = vmatpush.xpose.msra.mxu0 0.0
        %1194 = vmatpush.xpose.msra.mxu0 0.0
        %1195 = vmatpush.xpose.msra.mxu0 0.0
        %1196 = vmatpush.xpose.msra.mxu0 0.0
        %1197 = vmatpush.xpose.msra.mxu0 0.0
        %1198 = vmatpush.xpose.msra.mxu0 0.0
        %1199 = vmatpush.xpose.msra.mxu0 0.0
        %1200 = vmatpush.xpose.msra.mxu0 0.0
        %1201 = vmatpush.xpose.msra.mxu0 0.0
        %1202 = vmatpush.xpose.msra.mxu0 %v1185
        %1203 = vmatmul.f32.gmra.mxu0 %v1182
        %v1204 = vpop.f32.mrf.mxu0
        %v1205 = vadd.f32 0.0, %v1204
        %1206 = vdwg.mxu0
        %v1207 = vmul.f32 %v1179, 0.35355338
        %v1208 = vmul.f32 %v1205, 0.35355338
        %v1209 = vadd.f32 %v1207, %v981
        %v1210 = vadd.f32 %v1208, %v982
        %v1211 = vsel %vm924, %v1209, -inf
        %1212 = vmax.xlane.f32.xlu0 %v1211
        %v1213 = vpop.xlane.xlu0 %1212
        %v1214 = vsel %vm924, %v1210, -inf
        %1215 = vmax.xlane.f32.xlu0 %v1214
        %v1216 = vpop.xlane.xlu0 %1215
        %v1217 = vsub.f32 %v1209, %v1213
        %v1218 = vsub.f32 %v1210, %v1216
        %v1219 = vmul.f32 %v1217, 1.442695
        %v1220 = vpow.pop %v1219
        %v1221 = vmul.f32 %v1218, 1.442695
        %v1222 = vpow.pop %v1221
        %v1223 = vsel %vm924, %v1220, 0.0
        %1224 = vadd.xlane.f32.xlu0 %v1223
        %v1225 = vpop.xlane.xlu0 %1224
        %v1226 = vsel %vm924, %v1222, 0.0
        %1227 = vadd.xlane.f32.xlu0 %v1226
        %v1228 = vpop.xlane.xlu0 %1227
        %v1229 = vrcp.pop %v1225
        %v1230 = vrcp.pop %v1228
        %v1231 = vmul.f32 %v1220, %v1229
        %v1232 = vmul.f32 %v1222, %v1230
        %v1234 = vsel %vm924, %v1231, 0
        %1236 = vmatpush.msra.mxu0 0.0
        %1237 = vmatpush.msra.mxu0 0.0
        %1238 = vmatpush.msra.mxu0 0.0
        %1239 = vmatpush.msra.mxu0 0.0
        %1240 = vmatpush.msra.mxu0 0.0
        %1241 = vmatpush.msra.mxu0 0.0
        %1242 = vmatpush.msra.mxu0 0.0
        %1243 = vmatpush.msra.mxu0 0.0
        %1244 = vmatpush.msra.mxu0 0.0
        %1245 = vmatpush.msra.mxu0 0.0
        %1246 = vmatpush.msra.mxu0 0.0
        %1247 = vmatpush.msra.mxu0 0.0
        %1248 = vmatpush.msra.mxu0 0.0
        %1249 = vmatpush.msra.mxu0 0.0
        %1250 = vmatpush.msra.mxu0 0.0
        %1251 = vmatpush.msra.mxu0 %v1150
        %1252 = vmatmul.f32.gmra.mxu0 %v1234
        %v1253 = vpop.f32.mrf.mxu0
        %v1254 = vadd.f32 0.0, %v1253
        %1255 = vdwg.mxu0
        %v1257 = vsel %vm924, %v1232, 0
        %1259 = vmatpush.msra.mxu0 0.0
        %1260 = vmatpush.msra.mxu0 0.0
        %1261 = vmatpush.msra.mxu0 0.0
        %1262 = vmatpush.msra.mxu0 0.0
        %1263 = vmatpush.msra.mxu0 0.0
        %1264 = vmatpush.msra.mxu0 0.0
        %1265 = vmatpush.msra.mxu0 0.0
        %1266 = vmatpush.msra.mxu0 0.0
        %1267 = vmatpush.msra.mxu0 0.0
        %1268 = vmatpush.msra.mxu0 0.0
        %1269 = vmatpush.msra.mxu0 0.0
        %1270 = vmatpush.msra.mxu0 0.0
        %1271 = vmatpush.msra.mxu0 0.0
        %1272 = vmatpush.msra.mxu0 0.0
        %1273 = vmatpush.msra.mxu0 0.0
        %1274 = vmatpush.msra.mxu0 %v1153
        %1275 = vmatmul.f32.gmra.mxu0 %v1257
        %v1276 = vpop.f32.mrf.mxu0
        %v1277 = vadd.f32 0.0, %v1276
        %1278 = vdwg.mxu0
        %s1279 = scalar_lea.vmem %s779, 8
        %v1280 = vld [vmem:[%s1279] sm:$0xff]
        %v1282 = vsel %vm924, %v1254, 0
        %v1285 = vsel %vm924, %v1277, 0
        %1287 = vmatpush.msra.mxu0 0.0
        %1288 = vmatpush.msra.mxu0 0.0
        %1289 = vmatpush.msra.mxu0 0.0
        %1290 = vmatpush.msra.mxu0 0.0
        %1291 = vmatpush.msra.mxu0 0.0
        %1292 = vmatpush.msra.mxu0 0.0
        %1293 = vmatpush.msra.mxu0 0.0
        %1294 = vmatpush.msra.mxu0 0.0
        %1295 = vmatpush.msra.mxu0 0.0
        %1296 = vmatpush.msra.mxu0 0.0
        %1297 = vmatpush.msra.mxu0 0.0
        %1298 = vmatpush.msra.mxu0 0.0
        %1299 = vmatpush.msra.mxu0 0.0
        %1300 = vmatpush.msra.mxu0 0.0
        %1301 = vmatpush.msra.mxu0 0.0
        %1302 = vmatpush.msra.mxu0 %v1280
        %1303 = vmatmul.f32.gmra.mxu0 %v1282
        %v1304 = vpop.f32.mrf.mxu0
        %v1305 = vadd.f32 0.0, %v1304
        %1306 = vmatmul.f32.gmra.mxu0 %v1285
        %v1307 = vpop.f32.mrf.mxu0
        %v1308 = vadd.f32 0.0, %v1307
        %1309 = vdwg.mxu0
        %v1311 = vsel %vm924, %v1030, 0
        %v1314 = vsel %vm924, %v1053, 0
        %1316 = vmatpush.msra.mxu0 0.0
        %1317 = vmatpush.msra.mxu0 0.0
        %1318 = vmatpush.msra.mxu0 0.0
        %1319 = vmatpush.msra.mxu0 0.0
        %1320 = vmatpush.msra.mxu0 0.0
        %1321 = vmatpush.msra.mxu0 0.0
        %1322 = vmatpush.msra.mxu0 0.0
        %1323 = vmatpush.msra.mxu0 0.0
        %1324 = vmatpush.msra.mxu0 0.0
        %1325 = vmatpush.msra.mxu0 0.0
        %1326 = vmatpush.msra.mxu0 0.0
        %1327 = vmatpush.msra.mxu0 0.0
        %1328 = vmatpush.msra.mxu0 0.0
        %1329 = vmatpush.msra.mxu0 0.0
        %1330 = vmatpush.msra.mxu0 0.0
        %1331 = vmatpush.msra.mxu0 %v1055
        %1332 = vmatmul.f32.gmra.mxu0 %v1311
        %v1333 = vpop.f32.mrf.mxu0
        %v1334 = vadd.f32 %v1305, %v1333
        %1335 = vmatmul.f32.gmra.mxu0 %v1314
        %v1336 = vpop.f32.mrf.mxu0
        %v1337 = vadd.f32 %v1308, %v1336
        %1338 = vdwg.mxu0
        %s1339 = scalar_lea.vmem %s752, 64
        %v1340 = vld [vmem:[%s1339] sm:$0xff]
        %v1341 = vld [vmem:[%s1339 + $0x8] sm:$0xff]
        %v1342 = vld [vmem:[%s1339 + $0x10] sm:$0xff]
        %v1343 = vld [vmem:[%s1339 + $0x18] sm:$0xff]
        %s1344 = scalar_lea.vmem %s766, 2
        %v1345 = vld [vmem:[%s1344] sm:$0x1]
        %v1347 = vperm.slane %v1345, 0
        %1349 = vmatpush.msra.mxu0 0.0
        %1350 = vmatpush.msra.mxu0 0.0
        %1351 = vmatpush.msra.mxu0 0.0
        %1352 = vmatpush.msra.mxu0 0.0
        %1353 = vmatpush.msra.mxu0 0.0
        %1354 = vmatpush.msra.mxu0 0.0
        %1355 = vmatpush.msra.mxu0 0.0
        %1356 = vmatpush.msra.mxu0 0.0
        %1357 = vmatpush.msra.mxu0 0.0
        %1358 = vmatpush.msra.mxu0 0.0
        %1359 = vmatpush.msra.mxu0 0.0
        %1360 = vmatpush.msra.mxu0 0.0
        %1361 = vmatpush.msra.mxu0 %v1343
        %1362 = vmatpush.msra.mxu0 %v1342
        %1363 = vmatpush.msra.mxu0 %v1341
        %1364 = vmatpush.msra.mxu0 %v1340
        %1365 = vmatmul.f32.gmra.mxu0 %v834
        %v1366 = vpop.f32.mrf.mxu0
        %v1367 = vadd.f32 %v1347, %v1366
        %1368 = vmatmul.f32.gmra.mxu0 %v837
        %v1369 = vpop.f32.mrf.mxu0
        %v1370 = vadd.f32 %v1347, %v1369
        %1371 = vdwg.mxu0
        %s1372 = scalar_lea.vmem %s757, 64
        %v1373 = vld [vmem:[%s1372] sm:$0xff]
        %v1374 = vld [vmem:[%s1372 + $0x8] sm:$0xff]
        %v1375 = vld [vmem:[%s1372 + $0x10] sm:$0xff]
        %v1376 = vld [vmem:[%s1372 + $0x18] sm:$0xff]
        %s1377 = scalar_lea.vmem %s770, 2
        %v1378 = vld [vmem:[%s1377] sm:$0x1]
        %v1380 = vperm.slane %v1378, 0
        %1382 = vmatpush.msra.mxu0 0.0
        %1383 = vmatpush.msra.mxu0 0.0
        %1384 = vmatpush.msra.mxu0 0.0
        %1385 = vmatpush.msra.mxu0 0.0
        %1386 = vmatpush.msra.mxu0 0.0
        %1387 = vmatpush.msra.mxu0 0.0
        %1388 = vmatpush.msra.mxu0 0.0
        %1389 = vmatpush.msra.mxu0 0.0
        %1390 = vmatpush.msra.mxu0 0.0
        %1391 = vmatpush.msra.mxu0 0.0
        %1392 = vmatpush.msra.mxu0 0.0
        %1393 = vmatpush.msra.mxu0 0.0
        %1394 = vmatpush.msra.mxu0 %v1376
        %1395 = vmatpush.msra.mxu0 %v1375
        %1396 = vmatpush.msra.mxu0 %v1374
        %1397 = vmatpush.msra.mxu0 %v1373
        %1398 = vmatmul.f32.gmra.mxu0 %v834
        %v1399 = vpop.f32.mrf.mxu0
        %v1400 = vadd.f32 %v1380, %v1399
        %1401 = vmatmul.f32.gmra.mxu0 %v837
        %v1402 = vpop.f32.mrf.mxu0
        %v1403 = vadd.f32 %v1380, %v1402
        %1404 = vdwg.mxu0
        %s1405 = scalar_lea.vmem %s762, 64
        %v1406 = vld [vmem:[%s1405] sm:$0xff]
        %v1407 = vld [vmem:[%s1405 + $0x8] sm:$0xff]
        %v1408 = vld [vmem:[%s1405 + $0x10] sm:$0xff]
        %v1409 = vld [vmem:[%s1405 + $0x18] sm:$0xff]
        %s1410 = scalar_lea.vmem %s774, 2
        %v1411 = vld [vmem:[%s1410] sm:$0x1]
        %v1413 = vperm.slane %v1411, 0
        %1415 = vmatpush.msra.mxu0 0.0
        %1416 = vmatpush.msra.mxu0 0.0
        %1417 = vmatpush.msra.mxu0 0.0
        %1418 = vmatpush.msra.mxu0 0.0
        %1419 = vmatpush.msra.mxu0 0.0
        %1420 = vmatpush.msra.mxu0 0.0
        %1421 = vmatpush.msra.mxu0 0.0
        %1422 = vmatpush.msra.mxu0 0.0
        %1423 = vmatpush.msra.mxu0 0.0
        %1424 = vmatpush.msra.mxu0 0.0
        %1425 = vmatpush.msra.mxu0 0.0
        %1426 = vmatpush.msra.mxu0 0.0
        %1427 = vmatpush.msra.mxu0 %v1409
        %1428 = vmatpush.msra.mxu0 %v1408
        %1429 = vmatpush.msra.mxu0 %v1407
        %1430 = vmatpush.msra.mxu0 %v1406
        %1431 = vmatmul.f32.gmra.mxu0 %v834
        %v1432 = vpop.f32.mrf.mxu0
        %v1433 = vadd.f32 %v1413, %v1432
        %1434 = vmatmul.f32.gmra.mxu0 %v837
        %v1435 = vpop.f32.mrf.mxu0
        %v1436 = vadd.f32 %v1413, %v1435
        %1437 = vdwg.mxu0
        %v1439 = vsel %vm924, %v1367, 0
        %v1442 = vsel %vm924, %v1400, 0
        %1444 = vmatpush.xpose.msra.mxu0 0.0
        %1445 = vmatpush.xpose.msra.mxu0 0.0
        %1446 = vmatpush.xpose.msra.mxu0 0.0
        %1447 = vmatpush.xpose.msra.mxu0 0.0
        %1448 = vmatpush.xpose.msra.mxu0 0.0
        %1449 = vmatpush.xpose.msra.mxu0 0.0
        %1450 = vmatpush.xpose.msra.mxu0 0.0
        %1451 = vmatpush.xpose.msra.mxu0 0.0
        %1452 = vmatpush.xpose.msra.mxu0 0.0
        %1453 = vmatpush.xpose.msra.mxu0 0.0
        %1454 = vmatpush.xpose.msra.mxu0 0.0
        %1455 = vmatpush.xpose.msra.mxu0 0.0
        %1456 = vmatpush.xpose.msra.mxu0 0.0
        %1457 = vmatpush.xpose.msra.mxu0 0.0
        %1458 = vmatpush.xpose.msra.mxu0 0.0
        %1459 = vmatpush.xpose.msra.mxu0 %v1442
        %1460 = vmatmul.f32.gmra.mxu0 %v1439
        %v1461 = vpop.f32.mrf.mxu0
        %v1462 = vadd.f32 0.0, %v1461
        %1463 = vdwg.mxu0
        %v1465 = vsel %vm924, %v1370, 0
        %v1468 = vsel %vm924, %v1403, 0
        %1470 = vmatpush.xpose.msra.mxu0 0.0
        %1471 = vmatpush.xpose.msra.mxu0 0.0
        %1472 = vmatpush.xpose.msra.mxu0 0.0
        %1473 = vmatpush.xpose.msra.mxu0 0.0
        %1474 = vmatpush.xpose.msra.mxu0 0.0
        %1475 = vmatpush.xpose.msra.mxu0 0.0
        %1476 = vmatpush.xpose.msra.mxu0 0.0
        %1477 = vmatpush.xpose.msra.mxu0 0.0
        %1478 = vmatpush.xpose.msra.mxu0 0.0
        %1479 = vmatpush.xpose.msra.mxu0 0.0
        %1480 = vmatpush.xpose.msra.mxu0 0.0
        %1481 = vmatpush.xpose.msra.mxu0 0.0
        %1482 = vmatpush.xpose.msra.mxu0 0.0
        %1483 = vmatpush.xpose.msra.mxu0 0.0
        %1484 = vmatpush.xpose.msra.mxu0 0.0
        %1485 = vmatpush.xpose.msra.mxu0 %v1468
        %1486 = vmatmul.f32.gmra.mxu0 %v1465
        %v1487 = vpop.f32.mrf.mxu0
        %v1488 = vadd.f32 0.0, %v1487
        %1489 = vdwg.mxu0
        %v1490 = vmul.f32 %v1462, 0.35355338
        %v1491 = vmul.f32 %v1488, 0.35355338
        %v1492 = vadd.f32 %v1490, %v981
        %v1493 = vadd.f32 %v1491, %v982
        %v1494 = vsel %vm924, %v1492, -inf
        %1495 = vmax.xlane.f32.xlu0 %v1494
        %v1496 = vpop.xlane.xlu0 %1495
        %v1497 = vsel %vm924, %v1493, -inf
        %1498 = vmax.xlane.f32.xlu0 %v1497
        %v1499 = vpop.xlane.xlu0 %1498
        %v1500 = vsub.f32 %v1492, %v1496
        %v1501 = vsub.f32 %v1493, %v1499
        %v1502 = vmul.f32 %v1500, 1.442695
        %v1503 = vpow.pop %v1502
        %v1504 = vmul.f32 %v1501, 1.442695
        %v1505 = vpow.pop %v1504
        %v1506 = vsel %vm924, %v1503, 0.0
        %1507 = vadd.xlane.f32.xlu0 %v1506
        %v1508 = vpop.xlane.xlu0 %1507
        %v1509 = vsel %vm924, %v1505, 0.0
        %1510 = vadd.xlane.f32.xlu0 %v1509
        %v1511 = vpop.xlane.xlu0 %1510
        %v1512 = vrcp.pop %v1508
        %v1513 = vrcp.pop %v1511
        %v1514 = vmul.f32 %v1503, %v1512
        %v1515 = vmul.f32 %v1505, %v1513
        %v1517 = vsel %vm924, %v1514, 0
        %1519 = vmatpush.msra.mxu0 0.0
        %1520 = vmatpush.msra.mxu0 0.0
        %1521 = vmatpush.msra.mxu0 0.0
        %1522 = vmatpush.msra.mxu0 0.0
        %1523 = vmatpush.msra.mxu0 0.0
        %1524 = vmatpush.msra.mxu0 0.0
        %1525 = vmatpush.msra.mxu0 0.0
        %1526 = vmatpush.msra.mxu0 0.0
        %1527 = vmatpush.msra.mxu0 0.0
        %1528 = vmatpush.msra.mxu0 0.0
        %1529 = vmatpush.msra.mxu0 0.0
        %1530 = vmatpush.msra.mxu0 0.0
        %1531 = vmatpush.msra.mxu0 0.0
        %1532 = vmatpush.msra.mxu0 0.0
        %1533 = vmatpush.msra.mxu0 0.0
        %1534 = vmatpush.msra.mxu0 %v1433
        %1535 = vmatmul.f32.gmra.mxu0 %v1517
        %v1536 = vpop.f32.mrf.mxu0
        %v1537 = vadd.f32 0.0, %v1536
        %1538 = vdwg.mxu0
        %v1540 = vsel %vm924, %v1515, 0
        %1542 = vmatpush.msra.mxu0 0.0
        %1543 = vmatpush.msra.mxu0 0.0
        %1544 = vmatpush.msra.mxu0 0.0
        %1545 = vmatpush.msra.mxu0 0.0
        %1546 = vmatpush.msra.mxu0 0.0
        %1547 = vmatpush.msra.mxu0 0.0
        %1548 = vmatpush.msra.mxu0 0.0
        %1549 = vmatpush.msra.mxu0 0.0
        %1550 = vmatpush.msra.mxu0 0.0
        %1551 = vmatpush.msra.mxu0 0.0
        %1552 = vmatpush.msra.mxu0 0.0
        %1553 = vmatpush.msra.mxu0 0.0
        %1554 = vmatpush.msra.mxu0 0.0
        %1555 = vmatpush.msra.mxu0 0.0
        %1556 = vmatpush.msra.mxu0 0.0
        %1557 = vmatpush.msra.mxu0 %v1436
        %1558 = vmatmul.f32.gmra.mxu0 %v1540
        %v1559 = vpop.f32.mrf.mxu0
        %v1560 = vadd.f32 0.0, %v1559
        %1561 = vdwg.mxu0
        %s1562 = scalar_lea.vmem %s779, 16
        %v1563 = vld [vmem:[%s1562] sm:$0xff]
        %v1565 = vsel %vm924, %v1537, 0
        %v1568 = vsel %vm924, %v1560, 0
        %1570 = vmatpush.msra.mxu0 0.0
        %1571 = vmatpush.msra.mxu0 0.0
        %1572 = vmatpush.msra.mxu0 0.0
        %1573 = vmatpush.msra.mxu0 0.0
        %1574 = vmatpush.msra.mxu0 0.0
        %1575 = vmatpush.msra.mxu0 0.0
        %1576 = vmatpush.msra.mxu0 0.0
        %1577 = vmatpush.msra.mxu0 0.0
        %1578 = vmatpush.msra.mxu0 0.0
        %1579 = vmatpush.msra.mxu0 0.0
        %1580 = vmatpush.msra.mxu0 0.0
        %1581 = vmatpush.msra.mxu0 0.0
        %1582 = vmatpush.msra.mxu0 0.0
        %1583 = vmatpush.msra.mxu0 0.0
        %1584 = vmatpush.msra.mxu0 0.0
        %1585 = vmatpush.msra.mxu0 %v1563
        %1586 = vmatmul.f32.gmra.mxu0 %v1565
        %v1587 = vpop.f32.mrf.mxu0
        %v1588 = vadd.f32 0.0, %v1587
        %1589 = vmatmul.f32.gmra.mxu0 %v1568
        %v1590 = vpop.f32.mrf.mxu0
        %v1591 = vadd.f32 0.0, %v1590
        %1592 = vdwg.mxu0
        %v1593 = vadd.f32 %v1334, %v1588
        %v1594 = vadd.f32 %v1337, %v1591
        %s1595 = scalar_lea.vmem %s752, 96
        %v1596 = vld [vmem:[%s1595] sm:$0xff]
        %v1597 = vld [vmem:[%s1595 + $0x8] sm:$0xff]
        %v1598 = vld [vmem:[%s1595 + $0x10] sm:$0xff]
        %v1599 = vld [vmem:[%s1595 + $0x18] sm:$0xff]
        %s1600 = scalar_lea.vmem %s766, 3
        %v1601 = vld [vmem:[%s1600] sm:$0x1]
        %v1603 = vperm.slane %v1601, 0
        %1605 = vmatpush.msra.mxu0 0.0
        %1606 = vmatpush.msra.mxu0 0.0
        %1607 = vmatpush.msra.mxu0 0.0
        %1608 = vmatpush.msra.mxu0 0.0
        %1609 = vmatpush.msra.mxu0 0.0
        %1610 = vmatpush.msra.mxu0 0.0
        %1611 = vmatpush.msra.mxu0 0.0
        %1612 = vmatpush.msra.mxu0 0.0
        %1613 = vmatpush.msra.mxu0 0.0
        %1614 = vmatpush.msra.mxu0 0.0
        %1615 = vmatpush.msra.mxu0 0.0
        %1616 = vmatpush.msra.mxu0 0.0
        %1617 = vmatpush.msra.mxu0 %v1599
        %1618 = vmatpush.msra.mxu0 %v1598
        %1619 = vmatpush.msra.mxu0 %v1597
        %1620 = vmatpush.msra.mxu0 %v1596
        %1621 = vmatmul.f32.gmra.mxu0 %v834
        %v1622 = vpop.f32.mrf.mxu0
        %v1623 = vadd.f32 %v1603, %v1622
        %1624 = vmatmul.f32.gmra.mxu0 %v837
        %v1625 = vpop.f32.mrf.mxu0
        %v1626 = vadd.f32 %v1603, %v1625
        %1627 = vdwg.mxu0
        %s1628 = scalar_lea.vmem %s757, 96
        %v1629 = vld [vmem:[%s1628] sm:$0xff]
        %v1630 = vld [vmem:[%s1628 + $0x8] sm:$0xff]
        %v1631 = vld [vmem:[%s1628 + $0x10] sm:$0xff]
        %v1632 = vld [vmem:[%s1628 + $0x18] sm:$0xff]
        %s1633 = scalar_lea.vmem %s770, 3
        %v1634 = vld [vmem:[%s1633] sm:$0x1]
        %v1636 = vperm.slane %v1634, 0
        %1638 = vmatpush.msra.mxu0 0.0
        %1639 = vmatpush.msra.mxu0 0.0
        %1640 = vmatpush.msra.mxu0 0.0
        %1641 = vmatpush.msra.mxu0 0.0
        %1642 = vmatpush.msra.mxu0 0.0
        %1643 = vmatpush.msra.mxu0 0.0
        %1644 = vmatpush.msra.mxu0 0.0
        %1645 = vmatpush.msra.mxu0 0.0
        %1646 = vmatpush.msra.mxu0 0.0
        %1647 = vmatpush.msra.mxu0 0.0
        %1648 = vmatpush.msra.mxu0 0.0
        %1649 = vmatpush.msra.mxu0 0.0
        %1650 = vmatpush.msra.mxu0 %v1632
        %1651 = vmatpush.msra.mxu0 %v1631
        %1652 = vmatpush.msra.mxu0 %v1630
        %1653 = vmatpush.msra.mxu0 %v1629
        %1654 = vmatmul.f32.gmra.mxu0 %v834
        %v1655 = vpop.f32.mrf.mxu0
        %v1656 = vadd.f32 %v1636, %v1655
        %1657 = vmatmul.f32.gmra.mxu0 %v837
        %v1658 = vpop.f32.mrf.mxu0
        %v1659 = vadd.f32 %v1636, %v1658
        %1660 = vdwg.mxu0
        %s1661 = scalar_lea.vmem %s762, 96
        %v1662 = vld [vmem:[%s1661] sm:$0xff]
        %v1663 = vld [vmem:[%s1661 + $0x8] sm:$0xff]
        %v1664 = vld [vmem:[%s1661 + $0x10] sm:$0xff]
        %v1665 = vld [vmem:[%s1661 + $0x18] sm:$0xff]
        %s1666 = scalar_lea.vmem %s774, 3
        %v1667 = vld [vmem:[%s1666] sm:$0x1]
        %v1669 = vperm.slane %v1667, 0
        %1671 = vmatpush.msra.mxu0 0.0
        %1672 = vmatpush.msra.mxu0 0.0
        %1673 = vmatpush.msra.mxu0 0.0
        %1674 = vmatpush.msra.mxu0 0.0
        %1675 = vmatpush.msra.mxu0 0.0
        %1676 = vmatpush.msra.mxu0 0.0
        %1677 = vmatpush.msra.mxu0 0.0
        %1678 = vmatpush.msra.mxu0 0.0
        %1679 = vmatpush.msra.mxu0 0.0
        %1680 = vmatpush.msra.mxu0 0.0
        %1681 = vmatpush.msra.mxu0 0.0
        %1682 = vmatpush.msra.mxu0 0.0
        %1683 = vmatpush.msra.mxu0 %v1665
        %1684 = vmatpush.msra.mxu0 %v1664
        %1685 = vmatpush.msra.mxu0 %v1663
        %1686 = vmatpush.msra.mxu0 %v1662
        %1687 = vmatmul.f32.gmra.mxu0 %v834
        %v1688 = vpop.f32.mrf.mxu0
        %v1689 = vadd.f32 %v1669, %v1688
        %1690 = vmatmul.f32.gmra.mxu0 %v837
        %v1691 = vpop.f32.mrf.mxu0
        %v1692 = vadd.f32 %v1669, %v1691
        %1693 = vdwg.mxu0
        %v1695 = vsel %vm924, %v1623, 0
        %v1698 = vsel %vm924, %v1656, 0
        %1700 = vmatpush.xpose.msra.mxu0 0.0
        %1701 = vmatpush.xpose.msra.mxu0 0.0
        %1702 = vmatpush.xpose.msra.mxu0 0.0
        %1703 = vmatpush.xpose.msra.mxu0 0.0
        %1704 = vmatpush.xpose.msra.mxu0 0.0
        %1705 = vmatpush.xpose.msra.mxu0 0.0
        %1706 = vmatpush.xpose.msra.mxu0 0.0
        %1707 = vmatpush.xpose.msra.mxu0 0.0
        %1708 = vmatpush.xpose.msra.mxu0 0.0
        %1709 = vmatpush.xpose.msra.mxu0 0.0
        %1710 = vmatpush.xpose.msra.mxu0 0.0
        %1711 = vmatpush.xpose.msra.mxu0 0.0
        %1712 = vmatpush.xpose.msra.mxu0 0.0
        %1713 = vmatpush.xpose.msra.mxu0 0.0
        %1714 = vmatpush.xpose.msra.mxu0 0.0
        %1715 = vmatpush.xpose.msra.mxu0 %v1698
        %1716 = vmatmul.f32.gmra.mxu0 %v1695
        %v1717 = vpop.f32.mrf.mxu0
        %v1718 = vadd.f32 0.0, %v1717
        %1719 = vdwg.mxu0
        %v1721 = vsel %vm924, %v1626, 0
        %v1724 = vsel %vm924, %v1659, 0
        %1726 = vmatpush.xpose.msra.mxu0 0.0
        %1727 = vmatpush.xpose.msra.mxu0 0.0
        %1728 = vmatpush.xpose.msra.mxu0 0.0
        %1729 = vmatpush.xpose.msra.mxu0 0.0
        %1730 = vmatpush.xpose.msra.mxu0 0.0
        %1731 = vmatpush.xpose.msra.mxu0 0.0
        %1732 = vmatpush.xpose.msra.mxu0 0.0
        %1733 = vmatpush.xpose.msra.mxu0 0.0
        %1734 = vmatpush.xpose.msra.mxu0 0.0
        %1735 = vmatpush.xpose.msra.mxu0 0.0
        %1736 = vmatpush.xpose.msra.mxu0 0.0
        %1737 = vmatpush.xpose.msra.mxu0 0.0
        %1738 = vmatpush.xpose.msra.mxu0 0.0
        %1739 = vmatpush.xpose.msra.mxu0 0.0
        %1740 = vmatpush.xpose.msra.mxu0 0.0
        %1741 = vmatpush.xpose.msra.mxu0 %v1724
        %1742 = vmatmul.f32.gmra.mxu0 %v1721
        %v1743 = vpop.f32.mrf.mxu0
        %v1744 = vadd.f32 0.0, %v1743
        %1745 = vdwg.mxu0
        %v1746 = vmul.f32 %v1718, 0.35355338
        %v1747 = vmul.f32 %v1744, 0.35355338
        %v1748 = vadd.f32 %v1746, %v981
        %v1749 = vadd.f32 %v1747, %v982
        %v1750 = vsel %vm924, %v1748, -inf
        %1751 = vmax.xlane.f32.xlu0 %v1750
        %v1752 = vpop.xlane.xlu0 %1751
        %v1753 = vsel %vm924, %v1749, -inf
        %1754 = vmax.xlane.f32.xlu0 %v1753
        %v1755 = vpop.xlane.xlu0 %1754
        %v1756 = vsub.f32 %v1748, %v1752
        %v1757 = vsub.f32 %v1749, %v1755
        %v1758 = vmul.f32 %v1756, 1.442695
        %v1759 = vpow.pop %v1758
        %v1760 = vmul.f32 %v1757, 1.442695
        %v1761 = vpow.pop %v1760
        %v1762 = vsel %vm924, %v1759, 0.0
        %1763 = vadd.xlane.f32.xlu0 %v1762
        %v1764 = vpop.xlane.xlu0 %1763
        %v1765 = vsel %vm924, %v1761, 0.0
        %1766 = vadd.xlane.f32.xlu0 %v1765
        %v1767 = vpop.xlane.xlu0 %1766
        %v1768 = vrcp.pop %v1764
        %v1769 = vrcp.pop %v1767
        %v1770 = vmul.f32 %v1759, %v1768
        %v1771 = vmul.f32 %v1761, %v1769
        %v1773 = vsel %vm924, %v1770, 0
        %1775 = vmatpush.msra.mxu0 0.0
        %1776 = vmatpush.msra.mxu0 0.0
        %1777 = vmatpush.msra.mxu0 0.0
        %1778 = vmatpush.msra.mxu0 0.0
        %1779 = vmatpush.msra.mxu0 0.0
        %1780 = vmatpush.msra.mxu0 0.0
        %1781 = vmatpush.msra.mxu0 0.0
        %1782 = vmatpush.msra.mxu0 0.0
        %1783 = vmatpush.msra.mxu0 0.0
        %1784 = vmatpush.msra.mxu0 0.0
        %1785 = vmatpush.msra.mxu0 0.0
        %1786 = vmatpush.msra.mxu0 0.0
        %1787 = vmatpush.msra.mxu0 0.0
        %1788 = vmatpush.msra.mxu0 0.0
        %1789 = vmatpush.msra.mxu0 0.0
        %1790 = vmatpush.msra.mxu0 %v1689
        %1791 = vmatmul.f32.gmra.mxu0 %v1773
        %v1792 = vpop.f32.mrf.mxu0
        %v1793 = vadd.f32 0.0, %v1792
        %1794 = vdwg.mxu0
        %v1796 = vsel %vm924, %v1771, 0
        %1798 = vmatpush.msra.mxu0 0.0
        %1799 = vmatpush.msra.mxu0 0.0
        %1800 = vmatpush.msra.mxu0 0.0
        %1801 = vmatpush.msra.mxu0 0.0
        %1802 = vmatpush.msra.mxu0 0.0
        %1803 = vmatpush.msra.mxu0 0.0
        %1804 = vmatpush.msra.mxu0 0.0
        %1805 = vmatpush.msra.mxu0 0.0
        %1806 = vmatpush.msra.mxu0 0.0
        %1807 = vmatpush.msra.mxu0 0.0
        %1808 = vmatpush.msra.mxu0 0.0
        %1809 = vmatpush.msra.mxu0 0.0
        %1810 = vmatpush.msra.mxu0 0.0
        %1811 = vmatpush.msra.mxu0 0.0
        %1812 = vmatpush.msra.mxu0 0.0
        %1813 = vmatpush.msra.mxu0 %v1692
        %1814 = vmatmul.f32.gmra.mxu0 %v1796
        %v1815 = vpop.f32.mrf.mxu0
        %v1816 = vadd.f32 0.0, %v1815
        %1817 = vdwg.mxu0
        %s1818 = scalar_lea.vmem %s779, 24
        %v1819 = vld [vmem:[%s1818] sm:$0xff]
        %v1821 = vsel %vm924, %v1793, 0
        %v1824 = vsel %vm924, %v1816, 0
        %1826 = vmatpush.msra.mxu0 0.0
        %1827 = vmatpush.msra.mxu0 0.0
        %1828 = vmatpush.msra.mxu0 0.0
        %1829 = vmatpush.msra.mxu0 0.0
        %1830 = vmatpush.msra.mxu0 0.0
        %1831 = vmatpush.msra.mxu0 0.0
        %1832 = vmatpush.msra.mxu0 0.0
        %1833 = vmatpush.msra.mxu0 0.0
        %1834 = vmatpush.msra.mxu0 0.0
        %1835 = vmatpush.msra.mxu0 0.0
        %1836 = vmatpush.msra.mxu0 0.0
        %1837 = vmatpush.msra.mxu0 0.0
        %1838 = vmatpush.msra.mxu0 0.0
        %1839 = vmatpush.msra.mxu0 0.0
        %1840 = vmatpush.msra.mxu0 0.0
        %1841 = vmatpush.msra.mxu0 %v1819
        %1842 = vmatmul.f32.gmra.mxu0 %v1821
        %v1843 = vpop.f32.mrf.mxu0
        %v1844 = vadd.f32 0.0, %v1843
        %1845 = vmatmul.f32.gmra.mxu0 %v1824
        %v1846 = vpop.f32.mrf.mxu0
        %v1847 = vadd.f32 0.0, %v1846
        %1848 = vdwg.mxu0
        %v1849 = vadd.f32 %v1593, %v1844
        %v1850 = vadd.f32 %v1594, %v1847
        %v1851 = vld [vmem:[%s782] sm:$0x1]
        %v1853 = vperm.slane %v1851, 0
        %v1855 = vadd.f32 %v1849, %v1853
        %v1856 = vadd.f32 %v1850, %v1853
        %v1857 = vadd.f32 %v820, %v1855
        %v1858 = vadd.f32 %v821, %v1856
        %v1859 = vsel %vm832, %v1857, 0.0
        %1860 = vadd.xlane.f32.xlu0 %v1859
        %v1861 = vpop.xlane.xlu0 %1860
        %v1862 = vsel %vm832, %v1858, 0.0
        %1863 = vadd.xlane.f32.xlu0 %v1862
        %v1864 = vpop.xlane.xlu0 %1863
        %v1865 = vrcp.pop 32.0
        %v1866 = vmul.f32 32.0, %v1865
        %v1867 = vsub.f32 1.0, %v1866
        %v1868 = vmul.f32 %v1865, %v1867
        %v1869 = vadd.f32 %v1865, %v1868
        %vm1870 = vweird.f32 %v1865
        %v1871 = vsel %vm1870, %v1865, %v1869
        %v1872 = vmul.f32 %v1861, %v1871
        %v1873 = vmul.f32 %v1864, %v1871
        %v1874 = vsub.f32 %v1857, %v1872
        %v1875 = vsub.f32 %v1858, %v1873
        %v1876 = vmul.f32 %v1874, %v1874
        %v1877 = vmul.f32 %v1875, %v1875
        %v1878 = vsel %vm832, %v1876, 0.0
        %1879 = vadd.xlane.f32.xlu0 %v1878
        %v1880 = vpop.xlane.xlu0 %1879
        %v1881 = vsel %vm832, %v1877, 0.0
        %1882 = vadd.xlane.f32.xlu0 %v1881
        %v1883 = vpop.xlane.xlu0 %1882
        %v1884 = vmul.f32 %v1880, %v1871
        %v1885 = vmul.f32 %v1883, %v1871
        %v1886 = vadd.f32 %v1884, 1e-05
        %v1887 = vadd.f32 %v1885, 1e-05
        %v1888 = vrsqrt.pop %v1886
        %v1889 = vmul.f32 %v1888, %v1886
        %v1890 = vmul.f32 %v1889, %v1888
        %v1891 = vmul.f32 0.5, %v1890
        %v1892 = vsub.f32 1.5, %v1891
        %v1893 = vmul.f32 %v1888, %v1892
        %vm1894 = vweird.f32 %v1886
        %vm1895 = vweird.f32 %v1888
        %vm1896 = vmor %vm1894, %vm1895
        %v1897 = vsel %vm1896, %v1888, %v1893
        %v1898 = vrsqrt.pop %v1887
        %v1899 = vmul.f32 %v1898, %v1887
        %v1900 = vmul.f32 %v1899, %v1898
        %v1901 = vmul.f32 0.5, %v1900
        %v1902 = vsub.f32 1.5, %v1901
        %v1903 = vmul.f32 %v1898, %v1902
        %vm1904 = vweird.f32 %v1887
        %vm1905 = vweird.f32 %v1898
        %vm1906 = vmor %vm1904, %vm1905
        %v1907 = vsel %vm1906, %v1898, %v1903
        %v1908 = vmul.f32 %v1874, %v1897
        %v1909 = vmul.f32 %v1875, %v1907
        %v1910 = vld [vmem:[%s785] sm:$0x1]
        %v1912 = vperm.slane %v1910, 0
        %v1914 = vmul.f32 %v1908, %v1912
        %v1915 = vmul.f32 %v1909, %v1912
        %v1916 = vld [vmem:[%s788] sm:$0x1]
        %v1918 = vperm.slane %v1916, 0
        %v1920 = vadd.f32 %v1914, %v1918
        %v1921 = vadd.f32 %v1915, %v1918
        %v1922 = vld [vmem:[%s799] sm:$0xff]
        %v1923 = vld [vmem:[%s799 + $0x8] sm:$0xff]
        %v1924 = vld [vmem:[%s799 + $0x10] sm:$0xff]
        %v1925 = vld [vmem:[%s799 + $0x18] sm:$0xff]
        %v1926 = vld [vmem:[%s802] sm:$0x1]
        %v1928 = vperm.slane %v1926, 0
        %v1931 = vsel %vm832, %v1920, 0
        %v1934 = vsel %vm832, %v1921, 0
        %1936 = vmatpush.msra.mxu0 0.0
        %1937 = vmatpush.msra.mxu0 0.0
        %1938 = vmatpush.msra.mxu0 0.0
        %1939 = vmatpush.msra.mxu0 0.0
        %1940 = vmatpush.msra.mxu0 0.0
        %1941 = vmatpush.msra.mxu0 0.0
        %1942 = vmatpush.msra.mxu0 0.0
        %1943 = vmatpush.msra.mxu0 0.0
        %1944 = vmatpush.msra.mxu0 0.0
        %1945 = vmatpush.msra.mxu0 0.0
        %1946 = vmatpush.msra.mxu0 0.0
        %1947 = vmatpush.msra.mxu0 0.0
        %1948 = vmatpush.msra.mxu0 %v1925
        %1949 = vmatpush.msra.mxu0 %v1924
        %1950 = vmatpush.msra.mxu0 %v1923
        %1951 = vmatpush.msra.mxu0 %v1922
        %1952 = vmatmul.f32.gmra.mxu0 %v1931
        %v1953 = vpop.f32.mrf.mxu0
        %v1954 = vadd.f32 %v1928, %v1953
        %1955 = vmatmul.f32.gmra.mxu0 %v1934
        %v1956 = vpop.f32.mrf.mxu0
        %v1957 = vadd.f32 %v1928, %v1956
        %1958 = vdwg.mxu0
        %v1959 = vmax.f32 %v1954, 0.0
        %v1960 = vmax.f32 %v1957, 0.0
        %v1961 = vld [vmem:[%s807] sm:$0xff]
        %v1962 = vld [vmem:[%s807 + $0x8] sm:$0xff]
        %v1963 = vld [vmem:[%s807 + $0x10] sm:$0xff]
        %v1964 = vld [vmem:[%s807 + $0x18] sm:$0xff]
        %v1965 = vld [vmem:[%s807 + $0x20] sm:$0xff]
        %v1966 = vld [vmem:[%s807 + $0x28] sm:$0xff]
        %v1967 = vld [vmem:[%s807 + $0x30] sm:$0xff]
        %v1968 = vld [vmem:[%s807 + $0x38] sm:$0xff]
        %v1969 = vld [vmem:[%s807 + $0x40] sm:$0xff]
        %v1970 = vld [vmem:[%s807 + $0x48] sm:$0xff]
        %v1971 = vld [vmem:[%s807 + $0x50] sm:$0xff]
        %v1972 = vld [vmem:[%s807 + $0x58] sm:$0xff]
        %v1973 = vld [vmem:[%s807 + $0x60] sm:$0xff]
        %v1974 = vld [vmem:[%s807 + $0x68] sm:$0xff]
        %v1975 = vld [vmem:[%s807 + $0x70] sm:$0xff]
        %v1976 = vld [vmem:[%s807 + $0x78] sm:$0xff]
        %v1977 = vld [vmem:[%s810] sm:$0x1]
        %v1979 = vperm.slane %v1977, 0
        %1981 = vmatpush.msra.mxu0 %v1976
        %1982 = vmatpush.msra.mxu0 %v1975
        %1983 = vmatpush.msra.mxu0 %v1974
        %1984 = vmatpush.msra.mxu0 %v1973
        %1985 = vmatpush.msra.mxu0 %v1972
        %1986 = vmatpush.msra.mxu0 %v1971
        %1987 = vmatpush.msra.mxu0 %v1970
        %1988 = vmatpush.msra.mxu0 %v1969
        %1989 = vmatpush.msra.mxu0 %v1968
        %1990 = vmatpush.msra.mxu0 %v1967
        %1991 = vmatpush.msra.mxu0 %v1966
        %1992 = vmatpush.msra.mxu0 %v1965
        %1993 = vmatpush.msra.mxu0 %v1964
        %1994 = vmatpush.msra.mxu0 %v1963
        %1995 = vmatpush.msra.mxu0 %v1962
        %1996 = vmatpush.msra.mxu0 %v1961
        %1997 = vmatmul.f32.gmra.mxu0 %v1959
        %v1998 = vpop.f32.mrf.mxu0
        %v1999 = vadd.f32 %v1979, %v1998
        %2000 = vmatmul.f32.gmra.mxu0 %v1960
        %v2001 = vpop.f32.mrf.mxu0
        %v2002 = vadd.f32 %v1979, %v2001
        %2003 = vdwg.mxu0
        %v2004 = vadd.f32 %v1920, %v1999
        %v2005 = vadd.f32 %v1921, %v2002
        %v2006 = vsel %vm832, %v2004, 0.0
        %2007 = vadd.xlane.f32.xlu0 %v2006
        %v2008 = vpop.xlane.xlu0 %2007
        %v2009 = vsel %vm832, %v2005, 0.0
        %2010 = vadd.xlane.f32.xlu0 %v2009
        %v2011 = vpop.xlane.xlu0 %2010
        %v2012 = vmul.f32 %v2008, %v1871
        %v2013 = vmul.f32 %v2011, %v1871
        %v2014 = vsub.f32 %v2004, %v2012
        %v2015 = vsub.f32 %v2005, %v2013
        %v2016 = vmul.f32 %v2014, %v2014
        %v2017 = vmul.f32 %v2015, %v2015
        %v2018 = vsel %vm832, %v2016, 0.0
        %2019 = vadd.xlane.f32.xlu0 %v2018
        %v2020 = vpop.xlane.xlu0 %2019
        %v2021 = vsel %vm832, %v2017, 0.0
        %2022 = vadd.xlane.f32.xlu0 %v2021
        %v2023 = vpop.xlane.xlu0 %2022
        %v2024 = vmul.f32 %v2020, %v1871
        %v2025 = vmul.f32 %v2023, %v1871
        %v2026 = vadd.f32 %v2024, 1e-05
        %v2027 = vadd.f32 %v2025, 1e-05
        %v2028 = vrsqrt.pop %v2026
        %v2029 = vmul.f32 %v2028, %v2026
        %v2030 = vmul.f32 %v2029, %v2028
        %v2031 = vmul.f32 0.5, %v2030
        %v2032 = vsub.f32 1.5, %v2031
        %v2033 = vmul.f32 %v2028, %v2032
        %vm2034 = vweird.f32 %v2026
        %vm2035 = vweird.f32 %v2028
        %vm2036 = vmor %vm2034, %vm2035
        %v2037 = vsel %vm2036, %v2028, %v2033
        %v2038 = vrsqrt.pop %v2027
        %v2039 = vmul.f32 %v2038, %v2027
        %v2040 = vmul.f32 %v2039, %v2038
        %v2041 = vmul.f32 0.5, %v2040
        %v2042 = vsub.f32 1.5, %v2041
        %v2043 = vmul.f32 %v2038, %v2042
        %vm2044 = vweird.f32 %v2027
        %vm2045 = vweird.f32 %v2038
        %vm2046 = vmor %vm2044, %vm2045
        %v2047 = vsel %vm2046, %v2038, %v2043
        %v2048 = vmul.f32 %v2014, %v2037
        %v2049 = vmul.f32 %v2015, %v2047
        %v2050 = vld [vmem:[%s791] sm:$0x1]
        %v2052 = vperm.slane %v2050, 0
        %v2054 = vmul.f32 %v2048, %v2052
        %v2055 = vmul.f32 %v2049, %v2052
        %v2056 = vld [vmem:[%s794] sm:$0x1]
        %v2058 = vperm.slane %v2056, 0
        %v2060 = vadd.f32 %v2054, %v2058
        %v2061 = vadd.f32 %v2055, %v2058
        %2062 = vst.msk [vmem:[#allocation2] sm:$0xff] %vm832, %v2060
        %2063 = vst.msk [vmem:[#allocation2 + $0x8] sm:$0xff] %vm832, %v2061
        // Predicated region
        $region97: #{tpu_custom_call.1} parent=91 // pred_check
          %p2064 = pneg %p501
        $region98: #{tpu_custom_call.1} parent=91 // pred_check_branch
          %2066 = sbr.rel (%p2064) target = $region100
        $region99: #{tpu_custom_call.1} parent=91 // pred_region
          %2068 = vsyncadd [#allocation3], 0
          %s2069 = sshll.u32 [#allocation2], 4
          %s2070 = int_to_ptr.vmem [resolvable:$true] %s2069
          %s2071 = sshll.u32 %s18, 4
          %s2072 = int_to_ptr.hbm [resolvable:$true] %s2071
          %2077 = dma.vmem_to_hbm [thread:$0]  %s2070, 256, %s2072, [#allocation3], 128, 128, 8
        $region100: #{tpu_custom_call.1} parent=91 // pred_fallthru
          _
        // Predicated region
        $region101: #{tpu_custom_call.1} parent=91 // pred_check
          %p2078 = pneg %p501
        $region102: #{tpu_custom_call.1} parent=91 // pred_check_branch
          %2080 = sbr.rel (%p2078) target = $region104
        $region103: #{tpu_custom_call.1} parent=91 // pred_region
          %2082 = dma.done [#allocation3], 256
        $region104: #{tpu_custom_call.1} parent=91 // pred_fallthru
          _
      $region92: #{tpu_custom_call.1} parent=5 // pred_fallthru
        _
      %p2083 = scmp.le.s32.totalorder 2, %s25
      // Predicated region
      $region105: #{tpu_custom_call.1} parent=5 // pred_check
        %p2084 = pneg %p2083
      $region106: #{tpu_custom_call.1} parent=5 // pred_check_branch
        %2086 = sbr.rel (%p2084) target = $region108
      $region107: #{tpu_custom_call.1} parent=5 // pred_region
        %s2087 = ssub.s32 %s25, 2
      $region108: #{tpu_custom_call.1} parent=5 // pred_fallthru
        _
    $region6: #{tpu_custom_call.1} parent=1 // loop_footer
      %s29 = sadd.s32 1, %s25
    $region7: #{tpu_custom_call.1} parent=1 // loop_footer_branch
      %24 = sbr.rel target = $region3
    $region8: #{tpu_custom_call.1} parent=1 // loop_exit
      _
    %2088 = vsyncpa [#allocation3], 1
    %s2089 = scalar_lea.sflag [#allocation3], 1
    %2090 = vsyncpa %s2089, 1

</llo_original>
